<compile_context>
chip_gen: v7x
topology: tpu7x:2x2x1
jax: 0.10.0
libtpu: 0.0.40
codegen_flags: <defaults>
</compile_context>

<pallas_src>
import functools

import jax
import jax.numpy as jnp
import numpy as np
from jax.experimental import pallas as pl
from jax.experimental.pallas import tpu as pltpu

CPAD = 8    # channel padding: one f32 sublane tile
KTAPS = 9   # 3x3 conv taps


# -----------------------------------------------------------------------------
# Fused branch kernel: 3x (3x3 conv + bias [+ ReLU]) [+ residual + data consistency]
# -----------------------------------------------------------------------------
def _fused_cnn_kernel(*refs, width, cin, cout, do_dc):
    """One CNN branch on a (C, HW) slab (channels on sublanes, spatial on lanes).

    w_ref[l] is the layer-l flat weight of shape (CPAD, 9*CPAD) with
    w_flat[co, t*CPAD + ci] == Conv2d.weight[co, ci, t//3, t%3]; the stacked rhs is
    built from 9 cyclic lane rolls (XLU) of the activation, zeroed at image borders
    (and across folded batch boundaries) by precomputed masks.
    """
    if do_dc:
        x_ref, m_ref, w_ref, b_ref, org_ref, dcw_ref, o_ref = refs
    else:
        x_ref, m_ref, w_ref, b_ref, o_ref = refs

    x_in = x_ref[0]                                   # (cin, HWt) f32
    hwt = x_in.shape[-1]

    # Zero-extend the real channels to one sublane tile inside VMEM (no host pad).
    x = jnp.concatenate(
        [x_in, jnp.zeros((CPAD - cin, hwt), jnp.float32)], axis=0)   # (CPAD, HWt)

    # Hoist mask reads + the stacked (9*CPAD, HWt) mask out of the layer loop.
    m = m_ref[...]                                                    # (9, 1, HWt)
    mask_stack = jnp.concatenate(
        [jnp.broadcast_to(m[t], (CPAD, hwt)) for t in range(KTAPS)], axis=0)

    # Static lane shifts for the 9 taps; wrap-around is zeroed by the masks.
    shifts = [(-((t // 3 - 1) * width + (t % 3 - 1))) % hwt for t in range(KTAPS)]

    def conv3x3(act, layer, relu):
        # Stack the 9 rolled taps along sublanes -> ONE (CPAD, 72)@(72, HWt) matmul.
        taps = jnp.concatenate(
            [act if shifts[t] == 0 else pltpu.roll(act, shifts[t], 1)
             for t in range(KTAPS)], axis=0)                          # (72, HWt)
        taps = taps * mask_stack                                      # zero 'same' pad
        y = jnp.dot(w_ref[layer], taps,
                    preferred_element_type=jnp.float32) + b_ref[layer]
        return jnp.maximum(y, 0.0) if relu else y

    h = conv3x3(x, 0, relu=True)
    h = conv3x3(h, 1, relu=True)
    y = conv3x3(h, 2, relu=False)[:cout]                              # (cout, HWt)

    if do_dc:
        # kspace_output = kspace2 + kspace4
        # kspace_output -= (kspace_output - origin_kspace) * dc_weight
        combined = x_in + y
        y = combined - (combined - org_ref[0]) * dcw_ref[0, 0]

    o_ref[0] = y


def _run_branch(wpack, bpack, x, masks, width, *, cin, cout, do_dc,
                origin=None, dc_weight=None):
    """x: (B_eff, cin, HWt) f32 -> (B_eff, cout, HWt) f32 through one fused branch."""
    b_eff, _, hwt = x.shape
    kern = functools.partial(_fused_cnn_kernel, width=width, cin=cin,
                             cout=cout, do_dc=do_dc)

    x_spec = pl.BlockSpec((1, cin, hwt), lambda i: (i, 0, 0))
    out_spec = pl.BlockSpec((1, cout, hwt), lambda i: (i, 0, 0))
    const3 = lambda s: pl.BlockSpec(s, lambda i: (0, 0, 0))

    in_specs = [x_spec, const3(masks.shape), const3(wpack.shape), const3(bpack.shape)]
    args = [x, masks, wpack, bpack]
    if do_dc:
        in_specs += [
            pl.BlockSpec((1, cout, hwt), lambda i: (i, 0, 0)),
            pl.BlockSpec(memory_space=pltpu.MemorySpace.SMEM),   # dc_weight scalar
        ]
        args += [origin, jnp.asarray(dc_weight, jnp.float32).reshape(1, 1)]

    return pl.pallas_call(
        kern,
        out_shape=jax.ShapeDtypeStruct((b_eff, cout, hwt), jnp.float32),
        grid=(b_eff,),
        in_specs=in_specs,
        out_specs=out_spec,
        compiler_params=pltpu.CompilerParams(
            dimension_semantics=("parallel",)),
    )(*args)


def _make_tap_masks(H, W, reps=1):
    """(9, 1, reps*H*W) f32 validity masks for the 9 conv taps (zero 'same' padding).

    With reps>1 (batch folded into lanes) the per-image mask is tiled, which also
    zeroes roll wrap-around between adjacent images.
    """
    hh, ww = np.meshgrid(np.arange(H), np.arange(W), indexing="ij")
    m = np.zeros((KTAPS, 1, H * W), np.float32)
    for t in range(KTAPS):
        oh, ow = t // 3 - 1, t % 3 - 1
        valid = ((hh + oh >= 0) & (hh + oh < H) &
                 (ww + ow >= 0) & (ww + ow < W))
        m[t, 0] = valid.reshape(-1)
    if reps > 1:
        m = np.tile(m, (1, 1, reps))
    return jnp.asarray(m)


# -----------------------------------------------------------------------------
# Parameter init for the FGDNet / MWCNN stand-ins (3-layer 3x3 conv nets)
# -----------------------------------------------------------------------------
def _init_cnn_standin(key, cin, hid, cout):
    assert max(cin, hid, cout) <= CPAD
    ks = jax.random.split(key, 3)

    def layer(k, ci, co):
        w9 = np.zeros((KTAPS, CPAD, CPAD), np.float32)
        w9[:, :co, :ci] = np.asarray(
            jax.random.normal(k, (KTAPS, co, ci), jnp.float32)) / np.sqrt(KTAPS * ci)
        # Flat layout for the stacked-tap matmul:
        #   w_flat[co, t*CPAD + ci] == W[co, ci, t//3, t%3]
        w_flat = np.transpose(w9, (1, 0, 2)).reshape(CPAD, KTAPS * CPAD)
        return w_flat, np.zeros((CPAD, 1), np.float32)

    w0, b0 = layer(ks[0], cin, hid)
    w1, b1 = layer(ks[1], hid, hid)
    w2, b2 = layer(ks[2], hid, cout)
    # Pack the 3 layers into single operands to cut Pallas input streams.
    return {"w": jnp.asarray(np.stack([w0, w1, w2])),     # (3, CPAD, 9*CPAD)
            "b": jnp.asarray(np.stack([b0, b1, b2]))}     # (3, CPAD, 1)


def init_params(key, hid=8):
    k1, k2 = jax.random.split(key)
    return {
        "img_model": _init_cnn_standin(k1, 1, hid, 1),      # FGDNet stand-in
        "kspace_model": _init_cnn_standin(k2, 2, hid, 2),   # MWCNN stand-in
        "dc_weight": jnp.float32(1.0),                      # nn.Parameter(torch.tensor(1.0))
    }


def _tensorcores_per_chip():
    """Best-effort: v7x exposes 2 TensorCores per chip; v5e/v6e have 1."""
    try:
        kind = jax.devices()[0].device_kind.lower()
        if "v7" in kind:
            return 2
    except Exception:
        pass
    return 1


# -----------------------------------------------------------------------------
# XPDNetBlock2.forward
# -----------------------------------------------------------------------------
def xpdnet_block2_forward(params, image, origin_kspace, *, fold_batch=None):
    """image: (B, H, W) f32; origin_kspace: (B, H, W) complex64 -> (B, H, W) f32."""
    B, H, W = image.shape
    HW = H * W
    if fold_batch is None:
        # Single-TC v5e/v6e: fold batch into lanes (one fat step, no per-step
        # pipeline overhead).  v7x: keep grid=(B,) so both TCs get a batch element.
        fold_batch = _tensorcores_per_chip() < 2

    b_eff = 1 if fold_batch else B
    hwt = B * HW if fold_batch else HW
    masks = _make_tap_masks(H, W, reps=B if fold_batch else 1)

    # ---- image branch: image1 = FGDNet(image) -------------------------------
    img_in = image.reshape(b_eff, 1, hwt)
    img_out = _run_branch(params["img_model"]["w"], params["img_model"]["b"],
                          img_in, masks, W, cin=1, cout=1, do_dc=False)
    image1 = img_out.reshape(B, H, W)

    # ---- k-space branch ------------------------------------------------------
    # torch.fft.fftn with no dims transforms ALL axes (incl. batch); kept faithful.
    kspace2 = jnp.fft.fftn(image1)                                      # (B,H,W) c64
    stack_axis = 0 if fold_batch else 1
    k_in = jnp.stack([kspace2.real, kspace2.imag],
                     axis=stack_axis).reshape(b_eff, 2, hwt)
    origin = jnp.stack([origin_kspace.real, origin_kspace.imag],
                       axis=stack_axis).reshape(b_eff, 2, hwt)

    # MWCNN(kspace3) + residual + soft data consistency, fused in one kernel.
    k_out = _run_branch(params["kspace_model"]["w"], params["kspace_model"]["b"],
                        k_in, masks, W, cin=2, cout=2, do_dc=True,
                        origin=origin, dc_weight=params["dc_weight"])
    kspace_output = (k_out[:, 0] + 1j * k_out[:, 1]).reshape(B, H, W)

    image2 = jnp.fft.ifftn(kspace_output)
    return jnp.abs(image2)


# -----------------------------------------------------------------------------
if __name__ == "__main__":
    B, H, W = 2, 16, 16
    key = jax.random.PRNGKey(0)
    k_img, k_okr, k_oki, k_par = jax.random.split(key, 4)

    image = jax.random.normal(k_img, (B, H, W), jnp.float32)
    origin_kspace = (
        jax.random.normal(k_okr, (B, H, W), jnp.float32)
        + 1j * jax.random.normal(k_oki, (B, H, W), jnp.float32)
    ).astype(jnp.complex64)

    params = init_params(k_par, hid=8)

    fwd = jax.jit(xpdnet_block2_forward)
    out = jax.block_until_ready(fwd(params, image, origin_kspace))

    assert out.shape == (B, H, W), out.shape
    assert out.dtype == jnp.float32, out.dtype
    assert bool(jnp.all(jnp.isfinite(out)))
    print("KERNEL_OK")
</pallas_src>

<mosaic_0001>
module attributes {stable_mosaic.version = 11 : i64} {
  func.func @_fused_cnn_kernel(%arg0: i32, %arg1: memref<1x1x512xf32, #tpu.memory_space<vmem>>, %arg2: memref<9x1x512xf32, #tpu.memory_space<vmem>>, %arg3: memref<3x8x72xf32, #tpu.memory_space<vmem>>, %arg4: memref<3x8x1xf32, #tpu.memory_space<vmem>>, %arg5: memref<1x1x512xf32, #tpu.memory_space<vmem>>) attributes {dimension_semantics = [#tpu.dimension_semantics<parallel>], iteration_bounds = array<i64: 1>, scalar_prefetch = 0 : i64, scratch_operands = 0 : i64, tpu.core_type = #tpu.core_type<tc>, window_params = [{transform_indices = @transform_0, window_bounds = array<i64: 1, 1, 512>}, {pipeline_mode = #tpu.pipeline_mode<synchronous>, transform_indices = @transform_1, window_bounds = array<i64: 9, 1, 512>}, {pipeline_mode = #tpu.pipeline_mode<synchronous>, transform_indices = @transform_2, window_bounds = array<i64: 3, 8, 72>}, {pipeline_mode = #tpu.pipeline_mode<synchronous>, transform_indices = @transform_3, window_bounds = array<i64: 3, 8, 1>}, {transform_indices = @transform_4, window_bounds = array<i64: 1, 1, 512>}]} {
    %c0 = arith.constant 0 : index
    %c0_0 = arith.constant 0 : index
    %c0_1 = arith.constant 0 : index
    %0 = vector.load %arg1[%c0, %c0_0, %c0_1] : memref<1x1x512xf32, #tpu.memory_space<vmem>>, vector<1x1x512xf32>
    %1 = vector.shape_cast %0 : vector<1x1x512xf32> to vector<1x512xf32>
    %cst = arith.constant 0.000000e+00 : f32
    %2 = vector.broadcast %cst : f32 to vector<7x512xf32>
    %3 = tpu.concatenate %1, %2 in 0 : vector<1x512xf32>, vector<7x512xf32> -> vector<8x512xf32>
    %c0_2 = arith.constant 0 : index
    %c0_3 = arith.constant 0 : index
    %c0_4 = arith.constant 0 : index
    %4 = vector.load %arg2[%c0_2, %c0_3, %c0_4] : memref<9x1x512xf32, #tpu.memory_space<vmem>>, vector<9x1x512xf32>
    %5 = vector.extract_strided_slice %4 {offsets = [0, 0, 0], sizes = [1, 1, 512], strides = [1, 1, 1]} : vector<9x1x512xf32> to vector<1x1x512xf32>
    %6 = vector.shape_cast %5 : vector<1x1x512xf32> to vector<1x512xf32>
    %7 = vector.shape_cast %6 : vector<1x512xf32> to vector<1x512xf32>
    %8 = vector.broadcast %7 : vector<1x512xf32> to vector<8x512xf32>
    %9 = vector.extract_strided_slice %4 {offsets = [1, 0, 0], sizes = [1, 1, 512], strides = [1, 1, 1]} : vector<9x1x512xf32> to vector<1x1x512xf32>
    %10 = vector.shape_cast %9 : vector<1x1x512xf32> to vector<1x512xf32>
    %11 = vector.shape_cast %10 : vector<1x512xf32> to vector<1x512xf32>
    %12 = vector.broadcast %11 : vector<1x512xf32> to vector<8x512xf32>
    %13 = vector.extract_strided_slice %4 {offsets = [2, 0, 0], sizes = [1, 1, 512], strides = [1, 1, 1]} : vector<9x1x512xf32> to vector<1x1x512xf32>
    %14 = vector.shape_cast %13 : vector<1x1x512xf32> to vector<1x512xf32>
    %15 = vector.shape_cast %14 : vector<1x512xf32> to vector<1x512xf32>
    %16 = vector.broadcast %15 : vector<1x512xf32> to vector<8x512xf32>
    %17 = vector.extract_strided_slice %4 {offsets = [3, 0, 0], sizes = [1, 1, 512], strides = [1, 1, 1]} : vector<9x1x512xf32> to vector<1x1x512xf32>
    %18 = vector.shape_cast %17 : vector<1x1x512xf32> to vector<1x512xf32>
    %19 = vector.shape_cast %18 : vector<1x512xf32> to vector<1x512xf32>
    %20 = vector.broadcast %19 : vector<1x512xf32> to vector<8x512xf32>
    %21 = vector.extract_strided_slice %4 {offsets = [4, 0, 0], sizes = [1, 1, 512], strides = [1, 1, 1]} : vector<9x1x512xf32> to vector<1x1x512xf32>
    %22 = vector.shape_cast %21 : vector<1x1x512xf32> to vector<1x512xf32>
    %23 = vector.shape_cast %22 : vector<1x512xf32> to vector<1x512xf32>
    %24 = vector.broadcast %23 : vector<1x512xf32> to vector<8x512xf32>
    %25 = vector.extract_strided_slice %4 {offsets = [5, 0, 0], sizes = [1, 1, 512], strides = [1, 1, 1]} : vector<9x1x512xf32> to vector<1x1x512xf32>
    %26 = vector.shape_cast %25 : vector<1x1x512xf32> to vector<1x512xf32>
    %27 = vector.shape_cast %26 : vector<1x512xf32> to vector<1x512xf32>
    %28 = vector.broadcast %27 : vector<1x512xf32> to vector<8x512xf32>
    %29 = vector.extract_strided_slice %4 {offsets = [6, 0, 0], sizes = [1, 1, 512], strides = [1, 1, 1]} : vector<9x1x512xf32> to vector<1x1x512xf32>
    %30 = vector.shape_cast %29 : vector<1x1x512xf32> to vector<1x512xf32>
    %31 = vector.shape_cast %30 : vector<1x512xf32> to vector<1x512xf32>
    %32 = vector.broadcast %31 : vector<1x512xf32> to vector<8x512xf32>
    %33 = vector.extract_strided_slice %4 {offsets = [7, 0, 0], sizes = [1, 1, 512], strides = [1, 1, 1]} : vector<9x1x512xf32> to vector<1x1x512xf32>
    %34 = vector.shape_cast %33 : vector<1x1x512xf32> to vector<1x512xf32>
    %35 = vector.shape_cast %34 : vector<1x512xf32> to vector<1x512xf32>
    %36 = vector.broadcast %35 : vector<1x512xf32> to vector<8x512xf32>
    %37 = vector.extract_strided_slice %4 {offsets = [8, 0, 0], sizes = [1, 1, 512], strides = [1, 1, 1]} : vector<9x1x512xf32> to vector<1x1x512xf32>
    %38 = vector.shape_cast %37 : vector<1x1x512xf32> to vector<1x512xf32>
    %39 = vector.shape_cast %38 : vector<1x512xf32> to vector<1x512xf32>
    %40 = vector.broadcast %39 : vector<1x512xf32> to vector<8x512xf32>
    %41 = tpu.concatenate %8, %12, %16, %20, %24, %28, %32, %36, %40 in 0 : vector<8x512xf32>, vector<8x512xf32>, vector<8x512xf32>, vector<8x512xf32>, vector<8x512xf32>, vector<8x512xf32>, vector<8x512xf32>, vector<8x512xf32>, vector<8x512xf32> -> vector<72x512xf32>
    %c17_i32 = arith.constant 17 : i32
    %42 = tpu.dynamic_rotate %3 by %c17_i32 dim 1 : vector<8x512xf32>, i32 -> vector<8x512xf32>
    %c16_i32 = arith.constant 16 : i32
    %43 = tpu.dynamic_rotate %3 by %c16_i32 dim 1 : vector<8x512xf32>, i32 -> vector<8x512xf32>
    %c15_i32 = arith.constant 15 : i32
    %44 = tpu.dynamic_rotate %3 by %c15_i32 dim 1 : vector<8x512xf32>, i32 -> vector<8x512xf32>
    %c1_i32 = arith.constant 1 : i32
    %45 = tpu.dynamic_rotate %3 by %c1_i32 dim 1 : vector<8x512xf32>, i32 -> vector<8x512xf32>
    %c511_i32 = arith.constant 511 : i32
    %46 = tpu.dynamic_rotate %3 by %c511_i32 dim 1 : vector<8x512xf32>, i32 -> vector<8x512xf32>
    %c497_i32 = arith.constant 497 : i32
    %47 = tpu.dynamic_rotate %3 by %c497_i32 dim 1 : vector<8x512xf32>, i32 -> vector<8x512xf32>
    %c496_i32 = arith.constant 496 : i32
    %48 = tpu.dynamic_rotate %3 by %c496_i32 dim 1 : vector<8x512xf32>, i32 -> vector<8x512xf32>
    %c495_i32 = arith.constant 495 : i32
    %49 = tpu.dynamic_rotate %3 by %c495_i32 dim 1 : vector<8x512xf32>, i32 -> vector<8x512xf32>
    %50 = tpu.concatenate %42, %43, %44, %45, %3, %46, %47, %48, %49 in 0 : vector<8x512xf32>, vector<8x512xf32>, vector<8x512xf32>, vector<8x512xf32>, vector<8x512xf32>, vector<8x512xf32>, vector<8x512xf32>, vector<8x512xf32>, vector<8x512xf32> -> vector<72x512xf32>
    %51 = arith.mulf %50, %41 : vector<72x512xf32>
    %c0_5 = arith.constant 0 : index
    %c0_6 = arith.constant 0 : index
    %c0_7 = arith.constant 0 : index
    %52 = vector.load %arg3[%c0_5, %c0_6, %c0_7] : memref<3x8x72xf32, #tpu.memory_space<vmem>>, vector<1x8x72xf32>
    %53 = vector.shape_cast %52 : vector<1x8x72xf32> to vector<8x72xf32>
    %cst_8 = arith.constant dense<0.000000e+00> : vector<8x512xf32>
    %54 = tpu.matmul %53, %51, %cst_8 {dimension_numbers = #tpu.dot_dimension_numbers<[1], [0], [0], [1], [0, 0, 1, 1], [], []>} : vector<8x72xf32>, vector<72x512xf32>, vector<8x512xf32> -> vector<8x512xf32>
    %c0_9 = arith.constant 0 : index
    %c0_10 = arith.constant 0 : index
    %c0_11 = arith.constant 0 : index
    %55 = vector.load %arg4[%c0_9, %c0_10, %c0_11] : memref<3x8x1xf32, #tpu.memory_space<vmem>>, vector<1x8x1xf32>
    %56 = vector.shape_cast %55 : vector<1x8x1xf32> to vector<8x1xf32>
    %57 = vector.broadcast %56 : vector<8x1xf32> to vector<8x512xf32>
    %58 = arith.addf %54, %57 : vector<8x512xf32>
    %cst_12 = arith.constant 0.000000e+00 : f32
    %59 = vector.broadcast %cst_12 : f32 to vector<8x512xf32>
    %60 = arith.maximumf %58, %59 : vector<8x512xf32>
    %c17_i32_13 = arith.constant 17 : i32
    %61 = tpu.dynamic_rotate %60 by %c17_i32_13 dim 1 : vector<8x512xf32>, i32 -> vector<8x512xf32>
    %c16_i32_14 = arith.constant 16 : i32
    %62 = tpu.dynamic_rotate %60 by %c16_i32_14 dim 1 : vector<8x512xf32>, i32 -> vector<8x512xf32>
    %c15_i32_15 = arith.constant 15 : i32
    %63 = tpu.dynamic_rotate %60 by %c15_i32_15 dim 1 : vector<8x512xf32>, i32 -> vector<8x512xf32>
    %c1_i32_16 = arith.constant 1 : i32
    %64 = tpu.dynamic_rotate %60 by %c1_i32_16 dim 1 : vector<8x512xf32>, i32 -> vector<8x512xf32>
    %c511_i32_17 = arith.constant 511 : i32
    %65 = tpu.dynamic_rotate %60 by %c511_i32_17 dim 1 : vector<8x512xf32>, i32 -> vector<8x512xf32>
    %c497_i32_18 = arith.constant 497 : i32
    %66 = tpu.dynamic_rotate %60 by %c497_i32_18 dim 1 : vector<8x512xf32>, i32 -> vector<8x512xf32>
    %c496_i32_19 = arith.constant 496 : i32
    %67 = tpu.dynamic_rotate %60 by %c496_i32_19 dim 1 : vector<8x512xf32>, i32 -> vector<8x512xf32>
    %c495_i32_20 = arith.constant 495 : i32
    %68 = tpu.dynamic_rotate %60 by %c495_i32_20 dim 1 : vector<8x512xf32>, i32 -> vector<8x512xf32>
    %69 = tpu.concatenate %61, %62, %63, %64, %60, %65, %66, %67, %68 in 0 : vector<8x512xf32>, vector<8x512xf32>, vector<8x512xf32>, vector<8x512xf32>, vector<8x512xf32>, vector<8x512xf32>, vector<8x512xf32>, vector<8x512xf32>, vector<8x512xf32> -> vector<72x512xf32>
    %70 = arith.mulf %69, %41 : vector<72x512xf32>
    %c1 = arith.constant 1 : index
    %c0_21 = arith.constant 0 : index
    %c0_22 = arith.constant 0 : index
    %71 = vector.load %arg3[%c1, %c0_21, %c0_22] : memref<3x8x72xf32, #tpu.memory_space<vmem>>, vector<1x8x72xf32>
    %72 = vector.shape_cast %71 : vector<1x8x72xf32> to vector<8x72xf32>
    %cst_23 = arith.constant dense<0.000000e+00> : vector<8x512xf32>
    %73 = tpu.matmul %72, %70, %cst_23 {dimension_numbers = #tpu.dot_dimension_numbers<[1], [0], [0], [1], [0, 0, 1, 1], [], []>} : vector<8x72xf32>, vector<72x512xf32>, vector<8x512xf32> -> vector<8x512xf32>
    %c1_24 = arith.constant 1 : index
    %c0_25 = arith.constant 0 : index
    %c0_26 = arith.constant 0 : index
    %74 = vector.load %arg4[%c1_24, %c0_25, %c0_26] : memref<3x8x1xf32, #tpu.memory_space<vmem>>, vector<1x8x1xf32>
    %75 = vector.shape_cast %74 : vector<1x8x1xf32> to vector<8x1xf32>
    %76 = vector.broadcast %75 : vector<8x1xf32> to vector<8x512xf32>
    %77 = arith.addf %73, %76 : vector<8x512xf32>
    %cst_27 = arith.constant 0.000000e+00 : f32
    %78 = vector.broadcast %cst_27 : f32 to vector<8x512xf32>
    %79 = arith.maximumf %77, %78 : vector<8x512xf32>
    %c17_i32_28 = arith.constant 17 : i32
    %80 = tpu.dynamic_rotate %79 by %c17_i32_28 dim 1 : vector<8x512xf32>, i32 -> vector<8x512xf32>
    %c16_i32_29 = arith.constant 16 : i32
    %81 = tpu.dynamic_rotate %79 by %c16_i32_29 dim 1 : vector<8x512xf32>, i32 -> vector<8x512xf32>
    %c15_i32_30 = arith.constant 15 : i32
    %82 = tpu.dynamic_rotate %79 by %c15_i32_30 dim 1 : vector<8x512xf32>, i32 -> vector<8x512xf32>
    %c1_i32_31 = arith.constant 1 : i32
    %83 = tpu.dynamic_rotate %79 by %c1_i32_31 dim 1 : vector<8x512xf32>, i32 -> vector<8x512xf32>
    %c511_i32_32 = arith.constant 511 : i32
    %84 = tpu.dynamic_rotate %79 by %c511_i32_32 dim 1 : vector<8x512xf32>, i32 -> vector<8x512xf32>
    %c497_i32_33 = arith.constant 497 : i32
    %85 = tpu.dynamic_rotate %79 by %c497_i32_33 dim 1 : vector<8x512xf32>, i32 -> vector<8x512xf32>
    %c496_i32_34 = arith.constant 496 : i32
    %86 = tpu.dynamic_rotate %79 by %c496_i32_34 dim 1 : vector<8x512xf32>, i32 -> vector<8x512xf32>
    %c495_i32_35 = arith.constant 495 : i32
    %87 = tpu.dynamic_rotate %79 by %c495_i32_35 dim 1 : vector<8x512xf32>, i32 -> vector<8x512xf32>
    %88 = tpu.concatenate %80, %81, %82, %83, %79, %84, %85, %86, %87 in 0 : vector<8x512xf32>, vector<8x512xf32>, vector<8x512xf32>, vector<8x512xf32>, vector<8x512xf32>, vector<8x512xf32>, vector<8x512xf32>, vector<8x512xf32>, vector<8x512xf32> -> vector<72x512xf32>
    %89 = arith.mulf %88, %41 : vector<72x512xf32>
    %c2 = arith.constant 2 : index
    %c0_36 = arith.constant 0 : index
    %c0_37 = arith.constant 0 : index
    %90 = vector.load %arg3[%c2, %c0_36, %c0_37] : memref<3x8x72xf32, #tpu.memory_space<vmem>>, vector<1x8x72xf32>
    %91 = vector.shape_cast %90 : vector<1x8x72xf32> to vector<8x72xf32>
    %cst_38 = arith.constant dense<0.000000e+00> : vector<8x512xf32>
    %92 = tpu.matmul %91, %89, %cst_38 {dimension_numbers = #tpu.dot_dimension_numbers<[1], [0], [0], [1], [0, 0, 1, 1], [], []>} : vector<8x72xf32>, vector<72x512xf32>, vector<8x512xf32> -> vector<8x512xf32>
    %c2_39 = arith.constant 2 : index
    %c0_40 = arith.constant 0 : index
    %c0_41 = arith.constant 0 : index
    %93 = vector.load %arg4[%c2_39, %c0_40, %c0_41] : memref<3x8x1xf32, #tpu.memory_space<vmem>>, vector<1x8x1xf32>
    %94 = vector.shape_cast %93 : vector<1x8x1xf32> to vector<8x1xf32>
    %95 = vector.broadcast %94 : vector<8x1xf32> to vector<8x512xf32>
    %96 = arith.addf %92, %95 : vector<8x512xf32>
    %97 = vector.extract_strided_slice %96 {offsets = [0, 0], sizes = [1, 512], strides = [1, 1]} : vector<8x512xf32> to vector<1x512xf32>
    %c0_42 = arith.constant 0 : index
    %c0_43 = arith.constant 0 : index
    %c0_44 = arith.constant 0 : index
    %98 = vector.load %arg5[%c0_42, %c0_43, %c0_44] : memref<1x1x512xf32, #tpu.memory_space<vmem>>, vector<1x1x512xf32>
    %99 = vector.shape_cast %98 : vector<1x1x512xf32> to vector<1x512xf32>
    %100 = vector.shape_cast %97 : vector<1x512xf32> to vector<1x1x512xf32>
    tpu.vector_store %arg5[%c0_42, %c0_43, %c0_44], %100 {strides = array<i32>} : memref<1x1x512xf32, #tpu.memory_space<vmem>>, vector<1x1x512xf32>,
    return
  }
  func.func @transform_0(%arg0: i32) -> (i32, i32, i32) {
    %c0_i32 = arith.constant 0 : i32
    %c0_i32_0 = arith.constant 0 : i32
    %c0_i32_1 = arith.constant 0 : i32
    return %arg0, %c0_i32, %c0_i32_0 : i32, i32, i32
  }
  func.func @transform_1(%arg0: i32) -> (i32, i32, i32) {
    %c0_i32 = arith.constant 0 : i32
    %c0_i32_0 = arith.constant 0 : i32
    %c0_i32_1 = arith.constant 0 : i32
    %c0_i32_2 = arith.constant 0 : i32
    return %c0_i32, %c0_i32_0, %c0_i32_1 : i32, i32, i32
  }
  func.func @transform_2(%arg0: i32) -> (i32, i32, i32) {
    %c0_i32 = arith.constant 0 : i32
    %c0_i32_0 = arith.constant 0 : i32
    %c0_i32_1 = arith.constant 0 : i32
    %c0_i32_2 = arith.constant 0 : i32
    return %c0_i32, %c0_i32_0, %c0_i32_1 : i32, i32, i32
  }
  func.func @transform_3(%arg0: i32) -> (i32, i32, i32) {
    %c0_i32 = arith.constant 0 : i32
    %c0_i32_0 = arith.constant 0 : i32
    %c0_i32_1 = arith.constant 0 : i32
    %c0_i32_2 = arith.constant 0 : i32
    return %c0_i32, %c0_i32_0, %c0_i32_1 : i32, i32, i32
  }
  func.func @transform_4(%arg0: i32) -> (i32, i32, i32) {
    %c0_i32 = arith.constant 0 : i32
    %c0_i32_0 = arith.constant 0 : i32
    %c0_i32_1 = arith.constant 0 : i32
    return %arg0, %c0_i32, %c0_i32_0 : i32, i32, i32
  }
}

module attributes {stable_mosaic.version = 11 : i64} {
  func.func @_fused_cnn_kernel(%arg0: i32, %arg1: memref<1x2x512xf32, #tpu.memory_space<vmem>>, %arg2: memref<9x1x512xf32, #tpu.memory_space<vmem>>, %arg3: memref<3x8x72xf32, #tpu.memory_space<vmem>>, %arg4: memref<3x8x1xf32, #tpu.memory_space<vmem>>, %arg5: memref<1x2x512xf32, #tpu.memory_space<vmem>>, %arg6: memref<1x1xf32, #tpu.memory_space<smem>>, %arg7: memref<1x2x512xf32, #tpu.memory_space<vmem>>) attributes {dimension_semantics = [#tpu.dimension_semantics<parallel>], iteration_bounds = array<i64: 1>, scalar_prefetch = 0 : i64, scratch_operands = 0 : i64, tpu.core_type = #tpu.core_type<tc>, window_params = [{transform_indices = @transform_0, window_bounds = array<i64: 1, 2, 512>}, {pipeline_mode = #tpu.pipeline_mode<synchronous>, transform_indices = @transform_1, window_bounds = array<i64: 9, 1, 512>}, {pipeline_mode = #tpu.pipeline_mode<synchronous>, transform_indices = @transform_2, window_bounds = array<i64: 3, 8, 72>}, {pipeline_mode = #tpu.pipeline_mode<synchronous>, transform_indices = @transform_3, window_bounds = array<i64: 3, 8, 1>}, {transform_indices = @transform_4, window_bounds = array<i64: 1, 2, 512>}, {transform_indices = @transform_5, window_bounds = array<i64: 1, 1>}, {transform_indices = @transform_6, window_bounds = array<i64: 1, 2, 512>}]} {
    %c0 = arith.constant 0 : index
    %c0_0 = arith.constant 0 : index
    %c0_1 = arith.constant 0 : index
    %0 = vector.load %arg1[%c0, %c0_0, %c0_1] : memref<1x2x512xf32, #tpu.memory_space<vmem>>, vector<1x2x512xf32>
    %1 = vector.shape_cast %0 : vector<1x2x512xf32> to vector<2x512xf32>
    %cst = arith.constant 0.000000e+00 : f32
    %2 = vector.broadcast %cst : f32 to vector<6x512xf32>
    %3 = tpu.concatenate %1, %2 in 0 : vector<2x512xf32>, vector<6x512xf32> -> vector<8x512xf32>
    %c0_2 = arith.constant 0 : index
    %c0_3 = arith.constant 0 : index
    %c0_4 = arith.constant 0 : index
    %4 = vector.load %arg2[%c0_2, %c0_3, %c0_4] : memref<9x1x512xf32, #tpu.memory_space<vmem>>, vector<9x1x512xf32>
    %5 = vector.extract_strided_slice %4 {offsets = [0, 0, 0], sizes = [1, 1, 512], strides = [1, 1, 1]} : vector<9x1x512xf32> to vector<1x1x512xf32>
    %6 = vector.shape_cast %5 : vector<1x1x512xf32> to vector<1x512xf32>
    %7 = vector.shape_cast %6 : vector<1x512xf32> to vector<1x512xf32>
    %8 = vector.broadcast %7 : vector<1x512xf32> to vector<8x512xf32>
    %9 = vector.extract_strided_slice %4 {offsets = [1, 0, 0], sizes = [1, 1, 512], strides = [1, 1, 1]} : vector<9x1x512xf32> to vector<1x1x512xf32>
    %10 = vector.shape_cast %9 : vector<1x1x512xf32> to vector<1x512xf32>
    %11 = vector.shape_cast %10 : vector<1x512xf32> to vector<1x512xf32>
    %12 = vector.broadcast %11 : vector<1x512xf32> to vector<8x512xf32>
    %13 = vector.extract_strided_slice %4 {offsets = [2, 0, 0], sizes = [1, 1, 512], strides = [1, 1, 1]} : vector<9x1x512xf32> to vector<1x1x512xf32>
    %14 = vector.shape_cast %13 : vector<1x1x512xf32> to vector<1x512xf32>
    %15 = vector.shape_cast %14 : vector<1x512xf32> to vector<1x512xf32>
    %16 = vector.broadcast %15 : vector<1x512xf32> to vector<8x512xf32>
    %17 = vector.extract_strided_slice %4 {offsets = [3, 0, 0], sizes = [1, 1, 512], strides = [1, 1, 1]} : vector<9x1x512xf32> to vector<1x1x512xf32>
    %18 = vector.shape_cast %17 : vector<1x1x512xf32> to vector<1x512xf32>
    %19 = vector.shape_cast %18 : vector<1x512xf32> to vector<1x512xf32>
    %20 = vector.broadcast %19 : vector<1x512xf32> to vector<8x512xf32>
    %21 = vector.extract_strided_slice %4 {offsets = [4, 0, 0], sizes = [1, 1, 512], strides = [1, 1, 1]} : vector<9x1x512xf32> to vector<1x1x512xf32>
    %22 = vector.shape_cast %21 : vector<1x1x512xf32> to vector<1x512xf32>
    %23 = vector.shape_cast %22 : vector<1x512xf32> to vector<1x512xf32>
    %24 = vector.broadcast %23 : vector<1x512xf32> to vector<8x512xf32>
    %25 = vector.extract_strided_slice %4 {offsets = [5, 0, 0], sizes = [1, 1, 512], strides = [1, 1, 1]} : vector<9x1x512xf32> to vector<1x1x512xf32>
    %26 = vector.shape_cast %25 : vector<1x1x512xf32> to vector<1x512xf32>
    %27 = vector.shape_cast %26 : vector<1x512xf32> to vector<1x512xf32>
    %28 = vector.broadcast %27 : vector<1x512xf32> to vector<8x512xf32>
    %29 = vector.extract_strided_slice %4 {offsets = [6, 0, 0], sizes = [1, 1, 512], strides = [1, 1, 1]} : vector<9x1x512xf32> to vector<1x1x512xf32>
    %30 = vector.shape_cast %29 : vector<1x1x512xf32> to vector<1x512xf32>
    %31 = vector.shape_cast %30 : vector<1x512xf32> to vector<1x512xf32>
    %32 = vector.broadcast %31 : vector<1x512xf32> to vector<8x512xf32>
    %33 = vector.extract_strided_slice %4 {offsets = [7, 0, 0], sizes = [1, 1, 512], strides = [1, 1, 1]} : vector<9x1x512xf32> to vector<1x1x512xf32>
    %34 = vector.shape_cast %33 : vector<1x1x512xf32> to vector<1x512xf32>
    %35 = vector.shape_cast %34 : vector<1x512xf32> to vector<1x512xf32>
    %36 = vector.broadcast %35 : vector<1x512xf32> to vector<8x512xf32>
    %37 = vector.extract_strided_slice %4 {offsets = [8, 0, 0], sizes = [1, 1, 512], strides = [1, 1, 1]} : vector<9x1x512xf32> to vector<1x1x512xf32>
    %38 = vector.shape_cast %37 : vector<1x1x512xf32> to vector<1x512xf32>
    %39 = vector.shape_cast %38 : vector<1x512xf32> to vector<1x512xf32>
    %40 = vector.broadcast %39 : vector<1x512xf32> to vector<8x512xf32>
    %41 = tpu.concatenate %8, %12, %16, %20, %24, %28, %32, %36, %40 in 0 : vector<8x512xf32>, vector<8x512xf32>, vector<8x512xf32>, vector<8x512xf32>, vector<8x512xf32>, vector<8x512xf32>, vector<8x512xf32>, vector<8x512xf32>, vector<8x512xf32> -> vector<72x512xf32>
    %c17_i32 = arith.constant 17 : i32
    %42 = tpu.dynamic_rotate %3 by %c17_i32 dim 1 : vector<8x512xf32>, i32 -> vector<8x512xf32>
    %c16_i32 = arith.constant 16 : i32
    %43 = tpu.dynamic_rotate %3 by %c16_i32 dim 1 : vector<8x512xf32>, i32 -> vector<8x512xf32>
    %c15_i32 = arith.constant 15 : i32
    %44 = tpu.dynamic_rotate %3 by %c15_i32 dim 1 : vector<8x512xf32>, i32 -> vector<8x512xf32>
    %c1_i32 = arith.constant 1 : i32
    %45 = tpu.dynamic_rotate %3 by %c1_i32 dim 1 : vector<8x512xf32>, i32 -> vector<8x512xf32>
    %c511_i32 = arith.constant 511 : i32
    %46 = tpu.dynamic_rotate %3 by %c511_i32 dim 1 : vector<8x512xf32>, i32 -> vector<8x512xf32>
    %c497_i32 = arith.constant 497 : i32
    %47 = tpu.dynamic_rotate %3 by %c497_i32 dim 1 : vector<8x512xf32>, i32 -> vector<8x512xf32>
    %c496_i32 = arith.constant 496 : i32
    %48 = tpu.dynamic_rotate %3 by %c496_i32 dim 1 : vector<8x512xf32>, i32 -> vector<8x512xf32>
    %c495_i32 = arith.constant 495 : i32
    %49 = tpu.dynamic_rotate %3 by %c495_i32 dim 1 : vector<8x512xf32>, i32 -> vector<8x512xf32>
    %50 = tpu.concatenate %42, %43, %44, %45, %3, %46, %47, %48, %49 in 0 : vector<8x512xf32>, vector<8x512xf32>, vector<8x512xf32>, vector<8x512xf32>, vector<8x512xf32>, vector<8x512xf32>, vector<8x512xf32>, vector<8x512xf32>, vector<8x512xf32> -> vector<72x512xf32>
    %51 = arith.mulf %50, %41 : vector<72x512xf32>
    %c0_5 = arith.constant 0 : index
    %c0_6 = arith.constant 0 : index
    %c0_7 = arith.constant 0 : index
    %52 = vector.load %arg3[%c0_5, %c0_6, %c0_7] : memref<3x8x72xf32, #tpu.memory_space<vmem>>, vector<1x8x72xf32>
    %53 = vector.shape_cast %52 : vector<1x8x72xf32> to vector<8x72xf32>
    %cst_8 = arith.constant dense<0.000000e+00> : vector<8x512xf32>
    %54 = tpu.matmul %53, %51, %cst_8 {dimension_numbers = #tpu.dot_dimension_numbers<[1], [0], [0], [1], [0, 0, 1, 1], [], []>} : vector<8x72xf32>, vector<72x512xf32>, vector<8x512xf32> -> vector<8x512xf32>
    %c0_9 = arith.constant 0 : index
    %c0_10 = arith.constant 0 : index
    %c0_11 = arith.constant 0 : index
    %55 = vector.load %arg4[%c0_9, %c0_10, %c0_11] : memref<3x8x1xf32, #tpu.memory_space<vmem>>, vector<1x8x1xf32>
    %56 = vector.shape_cast %55 : vector<1x8x1xf32> to vector<8x1xf32>
    %57 = vector.broadcast %56 : vector<8x1xf32> to vector<8x512xf32>
    %58 = arith.addf %54, %57 : vector<8x512xf32>
    %cst_12 = arith.constant 0.000000e+00 : f32
    %59 = vector.broadcast %cst_12 : f32 to vector<8x512xf32>
    %60 = arith.maximumf %58, %59 : vector<8x512xf32>
    %c17_i32_13 = arith.constant 17 : i32
    %61 = tpu.dynamic_rotate %60 by %c17_i32_13 dim 1 : vector<8x512xf32>, i32 -> vector<8x512xf32>
    %c16_i32_14 = arith.constant 16 : i32
    %62 = tpu.dynamic_rotate %60 by %c16_i32_14 dim 1 : vector<8x512xf32>, i32 -> vector<8x512xf32>
    %c15_i32_15 = arith.constant 15 : i32
    %63 = tpu.dynamic_rotate %60 by %c15_i32_15 dim 1 : vector<8x512xf32>, i32 -> vector<8x512xf32>
    %c1_i32_16 = arith.constant 1 : i32
    %64 = tpu.dynamic_rotate %60 by %c1_i32_16 dim 1 : vector<8x512xf32>, i32 -> vector<8x512xf32>
    %c511_i32_17 = arith.constant 511 : i32
    %65 = tpu.dynamic_rotate %60 by %c511_i32_17 dim 1 : vector<8x512xf32>, i32 -> vector<8x512xf32>
    %c497_i32_18 = arith.constant 497 : i32
    %66 = tpu.dynamic_rotate %60 by %c497_i32_18 dim 1 : vector<8x512xf32>, i32 -> vector<8x512xf32>
    %c496_i32_19 = arith.constant 496 : i32
    %67 = tpu.dynamic_rotate %60 by %c496_i32_19 dim 1 : vector<8x512xf32>, i32 -> vector<8x512xf32>
    %c495_i32_20 = arith.constant 495 : i32
    %68 = tpu.dynamic_rotate %60 by %c495_i32_20 dim 1 : vector<8x512xf32>, i32 -> vector<8x512xf32>
    %69 = tpu.concatenate %61, %62, %63, %64, %60, %65, %66, %67, %68 in 0 : vector<8x512xf32>, vector<8x512xf32>, vector<8x512xf32>, vector<8x512xf32>, vector<8x512xf32>, vector<8x512xf32>, vector<8x512xf32>, vector<8x512xf32>, vector<8x512xf32> -> vector<72x512xf32>
    %70 = arith.mulf %69, %41 : vector<72x512xf32>
    %c1 = arith.constant 1 : index
    %c0_21 = arith.constant 0 : index
    %c0_22 = arith.constant 0 : index
    %71 = vector.load %arg3[%c1, %c0_21, %c0_22] : memref<3x8x72xf32, #tpu.memory_space<vmem>>, vector<1x8x72xf32>
    %72 = vector.shape_cast %71 : vector<1x8x72xf32> to vector<8x72xf32>
    %cst_23 = arith.constant dense<0.000000e+00> : vector<8x512xf32>
    %73 = tpu.matmul %72, %70, %cst_23 {dimension_numbers = #tpu.dot_dimension_numbers<[1], [0], [0], [1], [0, 0, 1, 1], [], []>} : vector<8x72xf32>, vector<72x512xf32>, vector<8x512xf32> -> vector<8x512xf32>
    %c1_24 = arith.constant 1 : index
    %c0_25 = arith.constant 0 : index
    %c0_26 = arith.constant 0 : index
    %74 = vector.load %arg4[%c1_24, %c0_25, %c0_26] : memref<3x8x1xf32, #tpu.memory_space<vmem>>, vector<1x8x1xf32>
    %75 = vector.shape_cast %74 : vector<1x8x1xf32> to vector<8x1xf32>
    %76 = vector.broadcast %75 : vector<8x1xf32> to vector<8x512xf32>
    %77 = arith.addf %73, %76 : vector<8x512xf32>
    %cst_27 = arith.constant 0.000000e+00 : f32
    %78 = vector.broadcast %cst_27 : f32 to vector<8x512xf32>
    %79 = arith.maximumf %77, %78 : vector<8x512xf32>
    %c17_i32_28 = arith.constant 17 : i32
    %80 = tpu.dynamic_rotate %79 by %c17_i32_28 dim 1 : vector<8x512xf32>, i32 -> vector<8x512xf32>
    %c16_i32_29 = arith.constant 16 : i32
    %81 = tpu.dynamic_rotate %79 by %c16_i32_29 dim 1 : vector<8x512xf32>, i32 -> vector<8x512xf32>
    %c15_i32_30 = arith.constant 15 : i32
    %82 = tpu.dynamic_rotate %79 by %c15_i32_30 dim 1 : vector<8x512xf32>, i32 -> vector<8x512xf32>
    %c1_i32_31 = arith.constant 1 : i32
    %83 = tpu.dynamic_rotate %79 by %c1_i32_31 dim 1 : vector<8x512xf32>, i32 -> vector<8x512xf32>
    %c511_i32_32 = arith.constant 511 : i32
    %84 = tpu.dynamic_rotate %79 by %c511_i32_32 dim 1 : vector<8x512xf32>, i32 -> vector<8x512xf32>
    %c497_i32_33 = arith.constant 497 : i32
    %85 = tpu.dynamic_rotate %79 by %c497_i32_33 dim 1 : vector<8x512xf32>, i32 -> vector<8x512xf32>
    %c496_i32_34 = arith.constant 496 : i32
    %86 = tpu.dynamic_rotate %79 by %c496_i32_34 dim 1 : vector<8x512xf32>, i32 -> vector<8x512xf32>
    %c495_i32_35 = arith.constant 495 : i32
    %87 = tpu.dynamic_rotate %79 by %c495_i32_35 dim 1 : vector<8x512xf32>, i32 -> vector<8x512xf32>
    %88 = tpu.concatenate %80, %81, %82, %83, %79, %84, %85, %86, %87 in 0 : vector<8x512xf32>, vector<8x512xf32>, vector<8x512xf32>, vector<8x512xf32>, vector<8x512xf32>, vector<8x512xf32>, vector<8x512xf32>, vector<8x512xf32>, vector<8x512xf32> -> vector<72x512xf32>
    %89 = arith.mulf %88, %41 : vector<72x512xf32>
    %c2 = arith.constant 2 : index
    %c0_36 = arith.constant 0 : index
    %c0_37 = arith.constant 0 : index
    %90 = vector.load %arg3[%c2, %c0_36, %c0_37] : memref<3x8x72xf32, #tpu.memory_space<vmem>>, vector<1x8x72xf32>
    %91 = vector.shape_cast %90 : vector<1x8x72xf32> to vector<8x72xf32>
    %cst_38 = arith.constant dense<0.000000e+00> : vector<8x512xf32>
    %92 = tpu.matmul %91, %89, %cst_38 {dimension_numbers = #tpu.dot_dimension_numbers<[1], [0], [0], [1], [0, 0, 1, 1], [], []>} : vector<8x72xf32>, vector<72x512xf32>, vector<8x512xf32> -> vector<8x512xf32>
    %c2_39 = arith.constant 2 : index
    %c0_40 = arith.constant 0 : index
    %c0_41 = arith.constant 0 : index
    %93 = vector.load %arg4[%c2_39, %c0_40, %c0_41] : memref<3x8x1xf32, #tpu.memory_space<vmem>>, vector<1x8x1xf32>
    %94 = vector.shape_cast %93 : vector<1x8x1xf32> to vector<8x1xf32>
    %95 = vector.broadcast %94 : vector<8x1xf32> to vector<8x512xf32>
    %96 = arith.addf %92, %95 : vector<8x512xf32>
    %97 = vector.extract_strided_slice %96 {offsets = [0, 0], sizes = [2, 512], strides = [1, 1]} : vector<8x512xf32> to vector<2x512xf32>
    %98 = arith.addf %1, %97 : vector<2x512xf32>
    %c0_42 = arith.constant 0 : index
    %c0_43 = arith.constant 0 : index
    %c0_44 = arith.constant 0 : index
    %99 = vector.load %arg5[%c0_42, %c0_43, %c0_44] : memref<1x2x512xf32, #tpu.memory_space<vmem>>, vector<1x2x512xf32>
    %100 = vector.shape_cast %99 : vector<1x2x512xf32> to vector<2x512xf32>
    %101 = arith.subf %98, %100 : vector<2x512xf32>
    %c0_45 = arith.constant 0 : index
    %c0_46 = arith.constant 0 : index
    %102 = memref.load %arg6[%c0_45, %c0_46] : memref<1x1xf32, #tpu.memory_space<smem>>
    %103 = vector.broadcast %102 : f32 to vector<2x512xf32>
    %104 = arith.mulf %101, %103 : vector<2x512xf32>
    %105 = arith.subf %98, %104 : vector<2x512xf32>
    %c0_47 = arith.constant 0 : index
    %c0_48 = arith.constant 0 : index
    %c0_49 = arith.constant 0 : index
    %106 = vector.load %arg7[%c0_47, %c0_48, %c0_49] : memref<1x2x512xf32, #tpu.memory_space<vmem>>, vector<1x2x512xf32>
    %107 = vector.shape_cast %106 : vector<1x2x512xf32> to vector<2x512xf32>
    %108 = vector.shape_cast %105 : vector<2x512xf32> to vector<1x2x512xf32>
    tpu.vector_store %arg7[%c0_47, %c0_48, %c0_49], %108 {strides = array<i32>} : memref<1x2x512xf32, #tpu.memory_space<vmem>>, vector<1x2x512xf32>,
    return
  }
  func.func @transform_0(%arg0: i32) -> (i32, i32, i32) {
    %c0_i32 = arith.constant 0 : i32
    %c0_i32_0 = arith.constant 0 : i32
    %c0_i32_1 = arith.constant 0 : i32
    return %arg0, %c0_i32, %c0_i32_0 : i32, i32, i32
  }
  func.func @transform_1(%arg0: i32) -> (i32, i32, i32) {
    %c0_i32 = arith.constant 0 : i32
    %c0_i32_0 = arith.constant 0 : i32
    %c0_i32_1 = arith.constant 0 : i32
    %c0_i32_2 = arith.constant 0 : i32
    return %c0_i32, %c0_i32_0, %c0_i32_1 : i32, i32, i32
  }
  func.func @transform_2(%arg0: i32) -> (i32, i32, i32) {
    %c0_i32 = arith.constant 0 : i32
    %c0_i32_0 = arith.constant 0 : i32
    %c0_i32_1 = arith.constant 0 : i32
    %c0_i32_2 = arith.constant 0 : i32
    return %c0_i32, %c0_i32_0, %c0_i32_1 : i32, i32, i32
  }
  func.func @transform_3(%arg0: i32) -> (i32, i32, i32) {
    %c0_i32 = arith.constant 0 : i32
    %c0_i32_0 = arith.constant 0 : i32
    %c0_i32_1 = arith.constant 0 : i32
    %c0_i32_2 = arith.constant 0 : i32
    return %c0_i32, %c0_i32_0, %c0_i32_1 : i32, i32, i32
  }
  func.func @transform_4(%arg0: i32) -> (i32, i32, i32) {
    %c0_i32 = arith.constant 0 : i32
    %c0_i32_0 = arith.constant 0 : i32
    %c0_i32_1 = arith.constant 0 : i32
    return %arg0, %c0_i32, %c0_i32_0 : i32, i32, i32
  }
  func.func @transform_5(%arg0: i32) -> (i32, i32) {
    %c0_i32 = arith.constant 0 : i32
    %c0_i32_0 = arith.constant 0 : i32
    %c0_i32_1 = arith.constant 0 : i32
    return %c0_i32, %c0_i32_0 : i32, i32
  }
  func.func @transform_6(%arg0: i32) -> (i32, i32, i32) {
    %c0_i32 = arith.constant 0 : i32
    %c0_i32_0 = arith.constant 0 : i32
    %c0_i32_1 = arith.constant 0 : i32
    return %arg0, %c0_i32, %c0_i32_0 : i32, i32, i32
  }
}

</mosaic_0001>

<llo_original>
// kernel: custom-call.1
$region0: #{custom-call.1}
  %s0 = inlined_call_operand.hbm [shape: c64[2,16,16], index: 0, kind: input, shape index: {}]
  %s1 = inlined_call_operand.vmem [shape: f32[2,16,16], index: 1, kind: output, shape index: {}]
  %s2 = scalar_lea.hbm %s0, 512
  $region1: #{custom-call.1} parent=0
    #allocation0 [shape = 's32[1]{0}', space=sflag, size = 0x4, scoped, tag = 'scoped memory for custom-call.1']
    %3 = vsyncpa [#allocation0], 0
    %s4 = sshll.u32 %s1, 4
    %s5 = int_to_ptr.vmem [resolvable:$true] %s4
    %7 = dma.hbm_to_vmem [thread:$0]  %s2, 512, %s5, [#allocation0]
    %8 = dma.done [#allocation0], 512
    %9 = vsyncpa [#allocation0], 1

// kernel: custom-call
$region0: #{custom-call}
  %s0 = inlined_call_operand.hbm [shape: c64[2,16,16], index: 0, kind: input, shape index: {}]
  %s1 = inlined_call_operand.vmem [shape: f32[2,16,16], index: 1, kind: output, shape index: {}]
  $region1: #{custom-call} parent=0
    #allocation0 [shape = 's32[1]{0}', space=sflag, size = 0x4, scoped, tag = 'scoped memory for custom-call']
    %2 = vsyncpa [#allocation0], 0
    %s3 = sshll.u32 %s1, 4
    %s4 = int_to_ptr.vmem [resolvable:$true] %s3
    %6 = dma.hbm_to_vmem [thread:$0]  %s0, 512, %s4, [#allocation0]
    %7 = dma.done [#allocation0], 512
    %8 = vsyncpa [#allocation0], 1

// kernel: xpdnet_block2_forward.2
$region0: #{xpdnet_block2_forward.2}
  #allocation0 [shape = 'u32[]', space=smem, size = 0x4, offset = 0x4, fixed_abs, tag = 'smem constant byte address 0x4 - core index']
  #allocation1 [shape = 'u32[144,128]{1,0:T(1,128)}', space=vmem, size = 0x12000, scoped, tag = 'internal scratch']
  %s0 = inlined_call_operand.vmem [shape: f32[1,1,512], index: 0, kind: input, shape index: {}]
  %s1 = inlined_call_operand.vmem [shape: f32[9,1,512], index: 1, kind: input, shape index: {}]
  %s2 = inlined_call_operand.vmem [shape: f32[3,8,72], index: 2, kind: input, shape index: {}]
  %s3 = inlined_call_operand.vmem [shape: f32[3,8,1], index: 3, kind: input, shape index: {}]
  %s4 = inlined_call_operand.vmem [shape: f32[1,1,512], index: 4, kind: output, shape index: {}]
  %s5 = sld [smem:[#allocation0]]
  $region26: #{xpdnet_block2_forward.2} parent=0
    _
  %s7 = ssub.s32 1, %s5
  %s8 = scalar_select 0, %s7, %s5
  // Predicated region
  $region2: #{xpdnet_block2_forward.2} parent=0 // pred_check
    _
  $region3: #{xpdnet_block2_forward.2} parent=0 // pred_check_branch
    %10 = sbr.rel (0) target = $region5
  $region4: #{xpdnet_block2_forward.2} parent=0 // pred_region
    _
  $region5: #{xpdnet_block2_forward.2} parent=0 // pred_fallthru
    _
  // Predicated region
  $region6: #{xpdnet_block2_forward.2} parent=0 // pred_check
    _
  $region7: #{xpdnet_block2_forward.2} parent=0 // pred_check_branch
    %12 = sbr.rel (0) target = $region9
  $region8: #{xpdnet_block2_forward.2} parent=0 // pred_region
    _
  $region9: #{xpdnet_block2_forward.2} parent=0 // pred_fallthru
    _
  // Predicated region
  $region10: #{xpdnet_block2_forward.2} parent=0 // pred_check
    _
  $region11: #{xpdnet_block2_forward.2} parent=0 // pred_check_branch
    %14 = sbr.rel (0) target = $region13
  $region12: #{xpdnet_block2_forward.2} parent=0 // pred_region
    _
  $region13: #{xpdnet_block2_forward.2} parent=0 // pred_fallthru
    _
  // Predicated region
  $region14: #{xpdnet_block2_forward.2} parent=0 // pred_check
    _
  $region15: #{xpdnet_block2_forward.2} parent=0 // pred_check_branch
    %16 = sbr.rel (0) target = $region17
  $region16: #{xpdnet_block2_forward.2} parent=0 // pred_region
    _
  $region17: #{xpdnet_block2_forward.2} parent=0 // pred_fallthru
    _
  %v17 = vld [vmem:[%s0] sm:$0xf]
  %v19 = vlaneseq
  %v20 = vshrl.u32 %v19, 7
  %v21 = vsub.s32 0, %v20
  %v22 = vrot.slane %v17, %v21
  %v23 = vlaneseq
  %v24 = vshrl.u32 %v23, 7
  %v25 = vsub.s32 1, %v24
  %v26 = vrot.slane %v17, %v25
  %v27 = vlaneseq
  %v28 = vshrl.u32 %v27, 7
  %v29 = vsub.s32 2, %v28
  %v30 = vrot.slane %v17, %v29
  %v31 = vlaneseq
  %v32 = vshrl.u32 %v31, 7
  %v33 = vsub.s32 3, %v32
  %v34 = vrot.slane %v17, %v33
  %vm39 = vcmask 1040384
  %v40 = vsel %vm39, %v22, 0.0
  %v41 = vsel %vm39, %v26, 0.0
  %v42 = vsel %vm39, %v30, 0.0
  %v43 = vsel %vm39, %v34, 0.0
  %v44 = vld [vmem:[%s1] sm:$0xf]
  %v45 = vld [vmem:[%s1 + $0x4] sm:$0xf]
  %v46 = vld [vmem:[%s1 + $0x8] sm:$0xf]
  %v47 = vld [vmem:[%s1 + $0xc] sm:$0xf]
  %v48 = vld [vmem:[%s1 + $0x10] sm:$0xf]
  %v49 = vld [vmem:[%s1 + $0x14] sm:$0xf]
  %v50 = vld [vmem:[%s1 + $0x18] sm:$0xf]
  %v51 = vld [vmem:[%s1 + $0x1c] sm:$0xf]
  %v52 = vld [vmem:[%s1 + $0x20] sm:$0xf]
  %v54 = vlaneseq
  %v55 = vshrl.u32 %v54, 7
  %v56 = vsub.s32 0, %v55
  %v57 = vrot.slane %v44, %v56
  %v58 = vlaneseq
  %v59 = vshrl.u32 %v58, 7
  %v60 = vsub.s32 1, %v59
  %v61 = vrot.slane %v44, %v60
  %v62 = vlaneseq
  %v63 = vshrl.u32 %v62, 7
  %v64 = vsub.s32 2, %v63
  %v65 = vrot.slane %v44, %v64
  %v66 = vlaneseq
  %v67 = vshrl.u32 %v66, 7
  %v68 = vsub.s32 3, %v67
  %v69 = vrot.slane %v44, %v68
  %v75 = vlaneseq
  %v76 = vshrl.u32 %v75, 7
  %v77 = vsub.s32 0, %v76
  %v78 = vrot.slane %v45, %v77
  %v79 = vlaneseq
  %v80 = vshrl.u32 %v79, 7
  %v81 = vsub.s32 1, %v80
  %v82 = vrot.slane %v45, %v81
  %v83 = vlaneseq
  %v84 = vshrl.u32 %v83, 7
  %v85 = vsub.s32 2, %v84
  %v86 = vrot.slane %v45, %v85
  %v87 = vlaneseq
  %v88 = vshrl.u32 %v87, 7
  %v89 = vsub.s32 3, %v88
  %v90 = vrot.slane %v45, %v89
  %v96 = vlaneseq
  %v97 = vshrl.u32 %v96, 7
  %v98 = vsub.s32 0, %v97
  %v99 = vrot.slane %v46, %v98
  %v100 = vlaneseq
  %v101 = vshrl.u32 %v100, 7
  %v102 = vsub.s32 1, %v101
  %v103 = vrot.slane %v46, %v102
  %v104 = vlaneseq
  %v105 = vshrl.u32 %v104, 7
  %v106 = vsub.s32 2, %v105
  %v107 = vrot.slane %v46, %v106
  %v108 = vlaneseq
  %v109 = vshrl.u32 %v108, 7
  %v110 = vsub.s32 3, %v109
  %v111 = vrot.slane %v46, %v110
  %v117 = vlaneseq
  %v118 = vshrl.u32 %v117, 7
  %v119 = vsub.s32 0, %v118
  %v120 = vrot.slane %v47, %v119
  %v121 = vlaneseq
  %v122 = vshrl.u32 %v121, 7
  %v123 = vsub.s32 1, %v122
  %v124 = vrot.slane %v47, %v123
  %v125 = vlaneseq
  %v126 = vshrl.u32 %v125, 7
  %v127 = vsub.s32 2, %v126
  %v128 = vrot.slane %v47, %v127
  %v129 = vlaneseq
  %v130 = vshrl.u32 %v129, 7
  %v131 = vsub.s32 3, %v130
  %v132 = vrot.slane %v47, %v131
  %v138 = vlaneseq
  %v139 = vshrl.u32 %v138, 7
  %v140 = vsub.s32 0, %v139
  %v141 = vrot.slane %v48, %v140
  %v142 = vlaneseq
  %v143 = vshrl.u32 %v142, 7
  %v144 = vsub.s32 1, %v143
  %v145 = vrot.slane %v48, %v144
  %v146 = vlaneseq
  %v147 = vshrl.u32 %v146, 7
  %v148 = vsub.s32 2, %v147
  %v149 = vrot.slane %v48, %v148
  %v150 = vlaneseq
  %v151 = vshrl.u32 %v150, 7
  %v152 = vsub.s32 3, %v151
  %v153 = vrot.slane %v48, %v152
  %v159 = vlaneseq
  %v160 = vshrl.u32 %v159, 7
  %v161 = vsub.s32 0, %v160
  %v162 = vrot.slane %v49, %v161
  %v163 = vlaneseq
  %v164 = vshrl.u32 %v163, 7
  %v165 = vsub.s32 1, %v164
  %v166 = vrot.slane %v49, %v165
  %v167 = vlaneseq
  %v168 = vshrl.u32 %v167, 7
  %v169 = vsub.s32 2, %v168
  %v170 = vrot.slane %v49, %v169
  %v171 = vlaneseq
  %v172 = vshrl.u32 %v171, 7
  %v173 = vsub.s32 3, %v172
  %v174 = vrot.slane %v49, %v173
  %v180 = vlaneseq
  %v181 = vshrl.u32 %v180, 7
  %v182 = vsub.s32 0, %v181
  %v183 = vrot.slane %v50, %v182
  %v184 = vlaneseq
  %v185 = vshrl.u32 %v184, 7
  %v186 = vsub.s32 1, %v185
  %v187 = vrot.slane %v50, %v186
  %v188 = vlaneseq
  %v189 = vshrl.u32 %v188, 7
  %v190 = vsub.s32 2, %v189
  %v191 = vrot.slane %v50, %v190
  %v192 = vlaneseq
  %v193 = vshrl.u32 %v192, 7
  %v194 = vsub.s32 3, %v193
  %v195 = vrot.slane %v50, %v194
  %v201 = vlaneseq
  %v202 = vshrl.u32 %v201, 7
  %v203 = vsub.s32 0, %v202
  %v204 = vrot.slane %v51, %v203
  %v205 = vlaneseq
  %v206 = vshrl.u32 %v205, 7
  %v207 = vsub.s32 1, %v206
  %v208 = vrot.slane %v51, %v207
  %v209 = vlaneseq
  %v210 = vshrl.u32 %v209, 7
  %v211 = vsub.s32 2, %v210
  %v212 = vrot.slane %v51, %v211
  %v213 = vlaneseq
  %v214 = vshrl.u32 %v213, 7
  %v215 = vsub.s32 3, %v214
  %v216 = vrot.slane %v51, %v215
  %v222 = vlaneseq
  %v223 = vshrl.u32 %v222, 7
  %v224 = vsub.s32 0, %v223
  %v225 = vrot.slane %v52, %v224
  %v226 = vlaneseq
  %v227 = vshrl.u32 %v226, 7
  %v228 = vsub.s32 1, %v227
  %v229 = vrot.slane %v52, %v228
  %v230 = vlaneseq
  %v231 = vshrl.u32 %v230, 7
  %v232 = vsub.s32 2, %v231
  %v233 = vrot.slane %v52, %v232
  %v234 = vlaneseq
  %v235 = vshrl.u32 %v234, 7
  %v236 = vsub.s32 3, %v235
  %v237 = vrot.slane %v52, %v236
  %242 = vrot.lane.b32.xlu0 %v40, 17
  %v243 = vpop.permute.xlu0 %242
  %244 = vrot.lane.b32.xlu0 %v41, 17
  %v245 = vpop.permute.xlu0 %244
  %246 = vrot.lane.b32.xlu0 %v42, 17
  %v247 = vpop.permute.xlu0 %246
  %248 = vrot.lane.b32.xlu0 %v43, 17
  %v249 = vpop.permute.xlu0 %248
  %v250 = vlaneseq
  %v251 = vand.u32 %v250, 127
  %vm252 = vcmp.lt.s32.totalorder %v251, 17
  %v253 = vsel %vm252, %v247, %v249
  %v254 = vsel %vm252, %v245, %v247
  %v255 = vsel %vm252, %v243, %v245
  %v256 = vsel %vm252, %v249, %v243
  %257 = vrot.lane.b32.xlu0 %v40, 16
  %v258 = vpop.permute.xlu0 %257
  %259 = vrot.lane.b32.xlu0 %v41, 16
  %v260 = vpop.permute.xlu0 %259
  %261 = vrot.lane.b32.xlu0 %v42, 16
  %v262 = vpop.permute.xlu0 %261
  %263 = vrot.lane.b32.xlu0 %v43, 16
  %v264 = vpop.permute.xlu0 %263
  %vm265 = vcmp.lt.s32.totalorder %v251, 16
  %v266 = vsel %vm265, %v262, %v264
  %v267 = vsel %vm265, %v260, %v262
  %v268 = vsel %vm265, %v258, %v260
  %v269 = vsel %vm265, %v264, %v258
  %270 = vrot.lane.b32.xlu0 %v40, 15
  %v271 = vpop.permute.xlu0 %270
  %272 = vrot.lane.b32.xlu0 %v41, 15
  %v273 = vpop.permute.xlu0 %272
  %274 = vrot.lane.b32.xlu0 %v42, 15
  %v275 = vpop.permute.xlu0 %274
  %276 = vrot.lane.b32.xlu0 %v43, 15
  %v277 = vpop.permute.xlu0 %276
  %vm278 = vcmp.lt.s32.totalorder %v251, 15
  %v279 = vsel %vm278, %v275, %v277
  %v280 = vsel %vm278, %v273, %v275
  %v281 = vsel %vm278, %v271, %v273
  %v282 = vsel %vm278, %v277, %v271
  %283 = vrot.lane.b32.xlu0 %v40, 1
  %v284 = vpop.permute.xlu0 %283
  %285 = vrot.lane.b32.xlu0 %v41, 1
  %v286 = vpop.permute.xlu0 %285
  %287 = vrot.lane.b32.xlu0 %v42, 1
  %v288 = vpop.permute.xlu0 %287
  %289 = vrot.lane.b32.xlu0 %v43, 1
  %v290 = vpop.permute.xlu0 %289
  %vm291 = vcmp.lt.s32.totalorder %v251, 1
  %v292 = vsel %vm291, %v288, %v290
  %v293 = vsel %vm291, %v286, %v288
  %v294 = vsel %vm291, %v284, %v286
  %v295 = vsel %vm291, %v290, %v284
  %296 = vrot.lane.b32.xlu0 %v40, 127
  %v297 = vpop.permute.xlu0 %296
  %298 = vrot.lane.b32.xlu0 %v41, 127
  %v299 = vpop.permute.xlu0 %298
  %300 = vrot.lane.b32.xlu0 %v42, 127
  %v301 = vpop.permute.xlu0 %300
  %302 = vrot.lane.b32.xlu0 %v43, 127
  %v303 = vpop.permute.xlu0 %302
  %vm304 = vcmp.lt.s32.totalorder %v251, 127
  %v305 = vsel %vm304, %v301, %v303
  %v306 = vsel %vm304, %v299, %v301
  %v307 = vsel %vm304, %v297, %v299
  %v308 = vsel %vm304, %v303, %v297
  %309 = vrot.lane.b32.xlu0 %v40, 113
  %v310 = vpop.permute.xlu0 %309
  %311 = vrot.lane.b32.xlu0 %v41, 113
  %v312 = vpop.permute.xlu0 %311
  %313 = vrot.lane.b32.xlu0 %v42, 113
  %v314 = vpop.permute.xlu0 %313
  %315 = vrot.lane.b32.xlu0 %v43, 113
  %v316 = vpop.permute.xlu0 %315
  %vm317 = vcmp.lt.s32.totalorder %v251, 113
  %v318 = vsel %vm317, %v314, %v316
  %v319 = vsel %vm317, %v312, %v314
  %v320 = vsel %vm317, %v310, %v312
  %v321 = vsel %vm317, %v316, %v310
  %322 = vrot.lane.b32.xlu0 %v40, 112
  %v323 = vpop.permute.xlu0 %322
  %324 = vrot.lane.b32.xlu0 %v41, 112
  %v325 = vpop.permute.xlu0 %324
  %326 = vrot.lane.b32.xlu0 %v42, 112
  %v327 = vpop.permute.xlu0 %326
  %328 = vrot.lane.b32.xlu0 %v43, 112
  %v329 = vpop.permute.xlu0 %328
  %vm330 = vcmp.lt.s32.totalorder %v251, 112
  %v331 = vsel %vm330, %v327, %v329
  %v332 = vsel %vm330, %v325, %v327
  %v333 = vsel %vm330, %v323, %v325
  %v334 = vsel %vm330, %v329, %v323
  %335 = vrot.lane.b32.xlu0 %v40, 111
  %v336 = vpop.permute.xlu0 %335
  %337 = vrot.lane.b32.xlu0 %v41, 111
  %v338 = vpop.permute.xlu0 %337
  %339 = vrot.lane.b32.xlu0 %v42, 111
  %v340 = vpop.permute.xlu0 %339
  %341 = vrot.lane.b32.xlu0 %v43, 111
  %v342 = vpop.permute.xlu0 %341
  %vm343 = vcmp.lt.s32.totalorder %v251, 111
  %v344 = vsel %vm343, %v340, %v342
  %v345 = vsel %vm343, %v338, %v340
  %v346 = vsel %vm343, %v336, %v338
  %v347 = vsel %vm343, %v342, %v336
  %v348 = vmul.f32 %v256, %v57
  %v349 = vmul.f32 %v255, %v61
  %v350 = vmul.f32 %v254, %v65
  %v351 = vmul.f32 %v253, %v69
  %v352 = vmul.f32 %v269, %v78
  %v353 = vmul.f32 %v268, %v82
  %v354 = vmul.f32 %v267, %v86
  %v355 = vmul.f32 %v266, %v90
  %v356 = vmul.f32 %v282, %v99
  %v357 = vmul.f32 %v281, %v103
  %v358 = vmul.f32 %v280, %v107
  %v359 = vmul.f32 %v279, %v111
  %v360 = vmul.f32 %v295, %v120
  %v361 = vmul.f32 %v294, %v124
  %v362 = vmul.f32 %v293, %v128
  %v363 = vmul.f32 %v292, %v132
  %v364 = vmul.f32 %v40, %v141
  %v365 = vmul.f32 %v41, %v145
  %v366 = vmul.f32 %v42, %v149
  %v367 = vmul.f32 %v43, %v153
  %v368 = vmul.f32 %v307, %v162
  %v369 = vmul.f32 %v306, %v166
  %v370 = vmul.f32 %v305, %v170
  %v371 = vmul.f32 %v308, %v174
  %v372 = vmul.f32 %v320, %v183
  %v373 = vmul.f32 %v319, %v187
  %v374 = vmul.f32 %v318, %v191
  %v375 = vmul.f32 %v321, %v195
  %v376 = vmul.f32 %v333, %v204
  %v377 = vmul.f32 %v332, %v208
  %v378 = vmul.f32 %v331, %v212
  %v379 = vmul.f32 %v334, %v216
  %v380 = vmul.f32 %v346, %v225
  %v381 = vmul.f32 %v345, %v229
  %v382 = vmul.f32 %v344, %v233
  %v383 = vmul.f32 %v347, %v237
  %v384 = vld [vmem:[%s2] sm:$0xff]
  %v385 = vld [vmem:[%s3] sm:$0xff]
  %387 = vset.pattern.permute.xlu0 0
  %388 = vperm.xlu0 %387, %v385
  %v389 = vpop.permute.xlu0 %388
  %vm391 = vcmask 588800
  %v393 = vsel %vm391, %v384, 0
  %395 = vmatprep.subr.mxu0 %v349
  %396 = vmatpush1.msra.mxu0 %v348
  %397 = vmatprep.subr.mxu0 %v353
  %398 = vmatpush1.msra.mxu0 %v352
  %399 = vmatprep.subr.mxu0 %v357
  %400 = vmatpush1.msra.mxu0 %v356
  %401 = vmatprep.subr.mxu0 %v361
  %402 = vmatpush1.msra.mxu0 %v360
  %403 = vmatprep.subr.mxu0 %v365
  %404 = vmatpush1.msra.mxu0 %v364
  %405 = vmatprep.subr.mxu0 %v369
  %406 = vmatpush1.msra.mxu0 %v368
  %407 = vmatprep.subr.mxu0 %v373
  %408 = vmatpush1.msra.mxu0 %v372
  %409 = vmatprep.subr.mxu0 %v377
  %410 = vmatpush1.msra.mxu0 %v376
  %411 = vmatprep.subr.mxu0 %v381
  %412 = vmatpush1.msra.mxu0 %v380
  %413 = vmatprep.subr.mxu0 0.0
  %414 = vmatpush1.msra.mxu0 0.0
  %415 = vmatprep.subr.mxu0 0.0
  %416 = vmatpush1.msra.mxu0 0.0
  %417 = vmatprep.subr.mxu0 0.0
  %418 = vmatpush1.msra.mxu0 0.0
  %419 = vmatprep.subr.mxu0 0.0
  %420 = vmatpush1.msra.mxu0 0.0
  %421 = vmatprep.subr.mxu0 0.0
  %422 = vmatpush1.msra.mxu0 0.0
  %423 = vmatprep.subr.mxu0 0.0
  %424 = vmatpush1.msra.mxu0 0.0
  %425 = vmatprep.subr.mxu0 0.0
  %426 = vmatpush1.msra.mxu0 0.0
  %427 = vmatprep.subr.mxu0 0.0
  %428 = vmatpush1.msra.mxu0 0.0
  %429 = vmatprep.subr.mxu0 0.0
  %430 = vmatpush1.msra.mxu0 0.0
  %431 = vmatprep.subr.mxu0 0.0
  %432 = vmatpush1.msra.mxu0 0.0
  %433 = vmatprep.subr.mxu0 0.0
  %434 = vmatpush1.msra.mxu0 0.0
  %435 = vmatprep.subr.mxu0 0.0
  %436 = vmatpush1.msra.mxu0 0.0
  %437 = vmatprep.subr.mxu0 0.0
  %438 = vmatpush1.msra.mxu0 0.0
  %439 = vmatprep.subr.mxu0 0.0
  %440 = vmatpush1.msra.mxu0 0.0
  %441 = vmatprep.subr.mxu0 0.0
  %442 = vmatpush1.msra.mxu0 0.0
  %443 = vmatprep.subr.mxu0 0.0
  %444 = vmatpush1.msra.mxu0 0.0
  %445 = vmatprep.subr.mxu0 0.0
  %446 = vmatpush1.msra.mxu0 0.0
  %447 = vmatprep.subr.mxu0 0.0
  %448 = vmatpush1.msra.mxu0 0.0
  %449 = vmatprep.subr.mxu0 0.0
  %450 = vmatpush1.msra.mxu0 0.0
  %451 = vmatprep.subr.mxu0 0.0
  %452 = vmatpush1.msra.mxu0 0.0
  %453 = vmatprep.subr.mxu0 0.0
  %454 = vmatpush1.msra.mxu0 0.0
  %455 = vmatprep.subr.mxu0 0.0
  %456 = vmatpush1.msra.mxu0 0.0
  %457 = vmatprep.subr.mxu0 0.0
  %458 = vmatpush1.msra.mxu0 0.0
  %459 = vmatprep.mubr.f32.mxu0 0.0
  %460 = vmatmul.mubr.f32.gmra.mrb[0].mxu0 %v393
  %v461 = vpop.f32.mrb[0].mxu0
  %v462 = vadd.f32 %v389, %v461
  %v463 = vpop.f32.mrb[0].mxu0
  %v464 = vadd.f32 %v389, %v463
  %465 = vdwg.mxu0
  %466 = vmatprep.subr.mxu0 %v351
  %467 = vmatpush1.msra.mxu0 %v350
  %468 = vmatprep.subr.mxu0 %v355
  %469 = vmatpush1.msra.mxu0 %v354
  %470 = vmatprep.subr.mxu0 %v359
  %471 = vmatpush1.msra.mxu0 %v358
  %472 = vmatprep.subr.mxu0 %v363
  %473 = vmatpush1.msra.mxu0 %v362
  %474 = vmatprep.subr.mxu0 %v367
  %475 = vmatpush1.msra.mxu0 %v366
  %476 = vmatprep.subr.mxu0 %v371
  %477 = vmatpush1.msra.mxu0 %v370
  %478 = vmatprep.subr.mxu0 %v375
  %479 = vmatpush1.msra.mxu0 %v374
  %480 = vmatprep.subr.mxu0 %v379
  %481 = vmatpush1.msra.mxu0 %v378
  %482 = vmatprep.subr.mxu0 %v383
  %483 = vmatpush1.msra.mxu0 %v382
  %484 = vmatprep.subr.mxu0 0.0
  %485 = vmatpush1.msra.mxu0 0.0
  %486 = vmatprep.subr.mxu0 0.0
  %487 = vmatpush1.msra.mxu0 0.0
  %488 = vmatprep.subr.mxu0 0.0
  %489 = vmatpush1.msra.mxu0 0.0
  %490 = vmatprep.subr.mxu0 0.0
  %491 = vmatpush1.msra.mxu0 0.0
  %492 = vmatprep.subr.mxu0 0.0
  %493 = vmatpush1.msra.mxu0 0.0
  %494 = vmatprep.subr.mxu0 0.0
  %495 = vmatpush1.msra.mxu0 0.0
  %496 = vmatprep.subr.mxu0 0.0
  %497 = vmatpush1.msra.mxu0 0.0
  %498 = vmatprep.subr.mxu0 0.0
  %499 = vmatpush1.msra.mxu0 0.0
  %500 = vmatprep.subr.mxu0 0.0
  %501 = vmatpush1.msra.mxu0 0.0
  %502 = vmatprep.subr.mxu0 0.0
  %503 = vmatpush1.msra.mxu0 0.0
  %504 = vmatprep.subr.mxu0 0.0
  %505 = vmatpush1.msra.mxu0 0.0
  %506 = vmatprep.subr.mxu0 0.0
  %507 = vmatpush1.msra.mxu0 0.0
  %508 = vmatprep.subr.mxu0 0.0
  %509 = vmatpush1.msra.mxu0 0.0
  %510 = vmatprep.subr.mxu0 0.0
  %511 = vmatpush1.msra.mxu0 0.0
  %512 = vmatprep.subr.mxu0 0.0
  %513 = vmatpush1.msra.mxu0 0.0
  %514 = vmatprep.subr.mxu0 0.0
  %515 = vmatpush1.msra.mxu0 0.0
  %516 = vmatprep.subr.mxu0 0.0
  %517 = vmatpush1.msra.mxu0 0.0
  %518 = vmatprep.subr.mxu0 0.0
  %519 = vmatpush1.msra.mxu0 0.0
  %520 = vmatprep.subr.mxu0 0.0
  %521 = vmatpush1.msra.mxu0 0.0
  %522 = vmatprep.subr.mxu0 0.0
  %523 = vmatpush1.msra.mxu0 0.0
  %524 = vmatprep.subr.mxu0 0.0
  %525 = vmatpush1.msra.mxu0 0.0
  %526 = vmatprep.subr.mxu0 0.0
  %527 = vmatpush1.msra.mxu0 0.0
  %528 = vmatprep.subr.mxu0 0.0
  %529 = vmatpush1.msra.mxu0 0.0
  %530 = vmatprep.mubr.f32.mxu0 0.0
  %531 = vmatmul.mubr.f32.gmra.mrb[0].mxu0 %v393
  %v532 = vpop.f32.mrb[0].mxu0
  %v533 = vadd.f32 %v389, %v532
  %v534 = vpop.f32.mrb[0].mxu0
  %v535 = vadd.f32 %v389, %v534
  %536 = vdwg.mxu0
  %v537 = vmax.f32 %v462, 0.0
  %v538 = vmax.f32 %v464, 0.0
  %v539 = vmax.f32 %v533, 0.0
  %v540 = vmax.f32 %v535, 0.0
  %541 = vrot.lane.b32.xlu0 %v537, 17
  %v542 = vpop.permute.xlu0 %541
  %543 = vrot.lane.b32.xlu0 %v538, 17
  %v544 = vpop.permute.xlu0 %543
  %545 = vrot.lane.b32.xlu0 %v539, 17
  %v546 = vpop.permute.xlu0 %545
  %547 = vrot.lane.b32.xlu0 %v540, 17
  %v548 = vpop.permute.xlu0 %547
  %v549 = vsel %vm252, %v546, %v548
  %v550 = vsel %vm252, %v544, %v546
  %v551 = vsel %vm252, %v542, %v544
  %v552 = vsel %vm252, %v548, %v542
  %553 = vrot.lane.b32.xlu0 %v537, 16
  %v554 = vpop.permute.xlu0 %553
  %555 = vrot.lane.b32.xlu0 %v538, 16
  %v556 = vpop.permute.xlu0 %555
  %557 = vrot.lane.b32.xlu0 %v539, 16
  %v558 = vpop.permute.xlu0 %557
  %559 = vrot.lane.b32.xlu0 %v540, 16
  %v560 = vpop.permute.xlu0 %559
  %v561 = vsel %vm265, %v558, %v560
  %v562 = vsel %vm265, %v556, %v558
  %v563 = vsel %vm265, %v554, %v556
  %v564 = vsel %vm265, %v560, %v554
  %565 = vrot.lane.b32.xlu0 %v537, 15
  %v566 = vpop.permute.xlu0 %565
  %567 = vrot.lane.b32.xlu0 %v538, 15
  %v568 = vpop.permute.xlu0 %567
  %569 = vrot.lane.b32.xlu0 %v539, 15
  %v570 = vpop.permute.xlu0 %569
  %571 = vrot.lane.b32.xlu0 %v540, 15
  %v572 = vpop.permute.xlu0 %571
  %v573 = vsel %vm278, %v570, %v572
  %v574 = vsel %vm278, %v568, %v570
  %v575 = vsel %vm278, %v566, %v568
  %v576 = vsel %vm278, %v572, %v566
  %577 = vrot.lane.b32.xlu0 %v537, 1
  %v578 = vpop.permute.xlu0 %577
  %579 = vrot.lane.b32.xlu0 %v538, 1
  %v580 = vpop.permute.xlu0 %579
  %581 = vrot.lane.b32.xlu0 %v539, 1
  %v582 = vpop.permute.xlu0 %581
  %583 = vrot.lane.b32.xlu0 %v540, 1
  %v584 = vpop.permute.xlu0 %583
  %v585 = vsel %vm291, %v582, %v584
  %v586 = vsel %vm291, %v580, %v582
  %v587 = vsel %vm291, %v578, %v580
  %v588 = vsel %vm291, %v584, %v578
  %589 = vrot.lane.b32.xlu0 %v537, 127
  %v590 = vpop.permute.xlu0 %589
  %591 = vrot.lane.b32.xlu0 %v538, 127
  %v592 = vpop.permute.xlu0 %591
  %593 = vrot.lane.b32.xlu0 %v539, 127
  %v594 = vpop.permute.xlu0 %593
  %595 = vrot.lane.b32.xlu0 %v540, 127
  %v596 = vpop.permute.xlu0 %595
  %v597 = vsel %vm304, %v594, %v596
  %v598 = vsel %vm304, %v592, %v594
  %v599 = vsel %vm304, %v590, %v592
  %v600 = vsel %vm304, %v596, %v590
  %601 = vrot.lane.b32.xlu0 %v537, 113
  %v602 = vpop.permute.xlu0 %601
  %603 = vrot.lane.b32.xlu0 %v538, 113
  %v604 = vpop.permute.xlu0 %603
  %605 = vrot.lane.b32.xlu0 %v539, 113
  %v606 = vpop.permute.xlu0 %605
  %607 = vrot.lane.b32.xlu0 %v540, 113
  %v608 = vpop.permute.xlu0 %607
  %v609 = vsel %vm317, %v606, %v608
  %v610 = vsel %vm317, %v604, %v606
  %v611 = vsel %vm317, %v602, %v604
  %v612 = vsel %vm317, %v608, %v602
  %613 = vrot.lane.b32.xlu0 %v537, 112
  %v614 = vpop.permute.xlu0 %613
  %615 = vrot.lane.b32.xlu0 %v538, 112
  %v616 = vpop.permute.xlu0 %615
  %617 = vrot.lane.b32.xlu0 %v539, 112
  %v618 = vpop.permute.xlu0 %617
  %619 = vrot.lane.b32.xlu0 %v540, 112
  %v620 = vpop.permute.xlu0 %619
  %v621 = vsel %vm330, %v618, %v620
  %v622 = vsel %vm330, %v616, %v618
  %v623 = vsel %vm330, %v614, %v616
  %v624 = vsel %vm330, %v620, %v614
  %625 = vrot.lane.b32.xlu0 %v537, 111
  %v626 = vpop.permute.xlu0 %625
  %627 = vrot.lane.b32.xlu0 %v538, 111
  %v628 = vpop.permute.xlu0 %627
  %629 = vrot.lane.b32.xlu0 %v539, 111
  %v630 = vpop.permute.xlu0 %629
  %631 = vrot.lane.b32.xlu0 %v540, 111
  %v632 = vpop.permute.xlu0 %631
  %v633 = vsel %vm343, %v630, %v632
  %v634 = vsel %vm343, %v628, %v630
  %v635 = vsel %vm343, %v626, %v628
  %v636 = vsel %vm343, %v632, %v626
  %v637 = vmul.f32 %v552, %v57
  %v638 = vmul.f32 %v551, %v61
  %v639 = vmul.f32 %v550, %v65
  %v640 = vmul.f32 %v549, %v69
  %v641 = vmul.f32 %v564, %v78
  %v642 = vmul.f32 %v563, %v82
  %v643 = vmul.f32 %v562, %v86
  %v644 = vmul.f32 %v561, %v90
  %v645 = vmul.f32 %v576, %v99
  %v646 = vmul.f32 %v575, %v103
  %v647 = vmul.f32 %v574, %v107
  %v648 = vmul.f32 %v573, %v111
  %v649 = vmul.f32 %v588, %v120
  %v650 = vmul.f32 %v587, %v124
  %v651 = vmul.f32 %v586, %v128
  %v652 = vmul.f32 %v585, %v132
  %v653 = vmul.f32 %v537, %v141
  %v654 = vmul.f32 %v538, %v145
  %v655 = vmul.f32 %v539, %v149
  %v656 = vmul.f32 %v540, %v153
  %v657 = vmul.f32 %v599, %v162
  %v658 = vmul.f32 %v598, %v166
  %v659 = vmul.f32 %v597, %v170
  %v660 = vmul.f32 %v600, %v174
  %v661 = vmul.f32 %v611, %v183
  %v662 = vmul.f32 %v610, %v187
  %v663 = vmul.f32 %v609, %v191
  %v664 = vmul.f32 %v612, %v195
  %v665 = vmul.f32 %v623, %v204
  %v666 = vmul.f32 %v622, %v208
  %v667 = vmul.f32 %v621, %v212
  %v668 = vmul.f32 %v624, %v216
  %v669 = vmul.f32 %v635, %v225
  %v670 = vmul.f32 %v634, %v229
  %v671 = vmul.f32 %v633, %v233
  %v672 = vmul.f32 %v636, %v237
  %s673 = scalar_lea.vmem %s2, 8
  %v674 = vld [vmem:[%s673] sm:$0xff]
  %s675 = scalar_lea.vmem %s3, 8
  %v676 = vld [vmem:[%s675] sm:$0xff]
  %678 = vset.pattern.permute.xlu0 0
  %679 = vperm.xlu0 %678, %v676
  %v680 = vpop.permute.xlu0 %679
  %v683 = vsel %vm391, %v674, 0
  %685 = vmatprep.subr.mxu0 %v638
  %686 = vmatpush1.msra.mxu0 %v637
  %687 = vmatprep.subr.mxu0 %v642
  %688 = vmatpush1.msra.mxu0 %v641
  %689 = vmatprep.subr.mxu0 %v646
  %690 = vmatpush1.msra.mxu0 %v645
  %691 = vmatprep.subr.mxu0 %v650
  %692 = vmatpush1.msra.mxu0 %v649
  %693 = vmatprep.subr.mxu0 %v654
  %694 = vmatpush1.msra.mxu0 %v653
  %695 = vmatprep.subr.mxu0 %v658
  %696 = vmatpush1.msra.mxu0 %v657
  %697 = vmatprep.subr.mxu0 %v662
  %698 = vmatpush1.msra.mxu0 %v661
  %699 = vmatprep.subr.mxu0 %v666
  %700 = vmatpush1.msra.mxu0 %v665
  %701 = vmatprep.subr.mxu0 %v670
  %702 = vmatpush1.msra.mxu0 %v669
  %703 = vmatprep.subr.mxu0 0.0
  %704 = vmatpush1.msra.mxu0 0.0
  %705 = vmatprep.subr.mxu0 0.0
  %706 = vmatpush1.msra.mxu0 0.0
  %707 = vmatprep.subr.mxu0 0.0
  %708 = vmatpush1.msra.mxu0 0.0
  %709 = vmatprep.subr.mxu0 0.0
  %710 = vmatpush1.msra.mxu0 0.0
  %711 = vmatprep.subr.mxu0 0.0
  %712 = vmatpush1.msra.mxu0 0.0
  %713 = vmatprep.subr.mxu0 0.0
  %714 = vmatpush1.msra.mxu0 0.0
  %715 = vmatprep.subr.mxu0 0.0
  %716 = vmatpush1.msra.mxu0 0.0
  %717 = vmatprep.subr.mxu0 0.0
  %718 = vmatpush1.msra.mxu0 0.0
  %719 = vmatprep.subr.mxu0 0.0
  %720 = vmatpush1.msra.mxu0 0.0
  %721 = vmatprep.subr.mxu0 0.0
  %722 = vmatpush1.msra.mxu0 0.0
  %723 = vmatprep.subr.mxu0 0.0
  %724 = vmatpush1.msra.mxu0 0.0
  %725 = vmatprep.subr.mxu0 0.0
  %726 = vmatpush1.msra.mxu0 0.0
  %727 = vmatprep.subr.mxu0 0.0
  %728 = vmatpush1.msra.mxu0 0.0
  %729 = vmatprep.subr.mxu0 0.0
  %730 = vmatpush1.msra.mxu0 0.0
  %731 = vmatprep.subr.mxu0 0.0
  %732 = vmatpush1.msra.mxu0 0.0
  %733 = vmatprep.subr.mxu0 0.0
  %734 = vmatpush1.msra.mxu0 0.0
  %735 = vmatprep.subr.mxu0 0.0
  %736 = vmatpush1.msra.mxu0 0.0
  %737 = vmatprep.subr.mxu0 0.0
  %738 = vmatpush1.msra.mxu0 0.0
  %739 = vmatprep.subr.mxu0 0.0
  %740 = vmatpush1.msra.mxu0 0.0
  %741 = vmatprep.subr.mxu0 0.0
  %742 = vmatpush1.msra.mxu0 0.0
  %743 = vmatprep.subr.mxu0 0.0
  %744 = vmatpush1.msra.mxu0 0.0
  %745 = vmatprep.subr.mxu0 0.0
  %746 = vmatpush1.msra.mxu0 0.0
  %747 = vmatprep.subr.mxu0 0.0
  %748 = vmatpush1.msra.mxu0 0.0
  %749 = vmatprep.mubr.f32.mxu0 0.0
  %750 = vmatmul.mubr.f32.gmra.mrb[0].mxu0 %v683
  %v751 = vpop.f32.mrb[0].mxu0
  %v752 = vadd.f32 %v680, %v751
  %v753 = vpop.f32.mrb[0].mxu0
  %v754 = vadd.f32 %v680, %v753
  %755 = vdwg.mxu0
  %756 = vmatprep.subr.mxu0 %v640
  %757 = vmatpush1.msra.mxu0 %v639
  %758 = vmatprep.subr.mxu0 %v644
  %759 = vmatpush1.msra.mxu0 %v643
  %760 = vmatprep.subr.mxu0 %v648
  %761 = vmatpush1.msra.mxu0 %v647
  %762 = vmatprep.subr.mxu0 %v652
  %763 = vmatpush1.msra.mxu0 %v651
  %764 = vmatprep.subr.mxu0 %v656
  %765 = vmatpush1.msra.mxu0 %v655
  %766 = vmatprep.subr.mxu0 %v660
  %767 = vmatpush1.msra.mxu0 %v659
  %768 = vmatprep.subr.mxu0 %v664
  %769 = vmatpush1.msra.mxu0 %v663
  %770 = vmatprep.subr.mxu0 %v668
  %771 = vmatpush1.msra.mxu0 %v667
  %772 = vmatprep.subr.mxu0 %v672
  %773 = vmatpush1.msra.mxu0 %v671
  %774 = vmatprep.subr.mxu0 0.0
  %775 = vmatpush1.msra.mxu0 0.0
  %776 = vmatprep.subr.mxu0 0.0
  %777 = vmatpush1.msra.mxu0 0.0
  %778 = vmatprep.subr.mxu0 0.0
  %779 = vmatpush1.msra.mxu0 0.0
  %780 = vmatprep.subr.mxu0 0.0
  %781 = vmatpush1.msra.mxu0 0.0
  %782 = vmatprep.subr.mxu0 0.0
  %783 = vmatpush1.msra.mxu0 0.0
  %784 = vmatprep.subr.mxu0 0.0
  %785 = vmatpush1.msra.mxu0 0.0
  %786 = vmatprep.subr.mxu0 0.0
  %787 = vmatpush1.msra.mxu0 0.0
  %788 = vmatprep.subr.mxu0 0.0
  %789 = vmatpush1.msra.mxu0 0.0
  %790 = vmatprep.subr.mxu0 0.0
  %791 = vmatpush1.msra.mxu0 0.0
  %792 = vmatprep.subr.mxu0 0.0
  %793 = vmatpush1.msra.mxu0 0.0
  %794 = vmatprep.subr.mxu0 0.0
  %795 = vmatpush1.msra.mxu0 0.0
  %796 = vmatprep.subr.mxu0 0.0
  %797 = vmatpush1.msra.mxu0 0.0
  %798 = vmatprep.subr.mxu0 0.0
  %799 = vmatpush1.msra.mxu0 0.0
  %800 = vmatprep.subr.mxu0 0.0
  %801 = vmatpush1.msra.mxu0 0.0
  %802 = vmatprep.subr.mxu0 0.0
  %803 = vmatpush1.msra.mxu0 0.0
  %804 = vmatprep.subr.mxu0 0.0
  %805 = vmatpush1.msra.mxu0 0.0
  %806 = vmatprep.subr.mxu0 0.0
  %807 = vmatpush1.msra.mxu0 0.0
  %808 = vmatprep.subr.mxu0 0.0
  %809 = vmatpush1.msra.mxu0 0.0
  %810 = vmatprep.subr.mxu0 0.0
  %811 = vmatpush1.msra.mxu0 0.0
  %812 = vmatprep.subr.mxu0 0.0
  %813 = vmatpush1.msra.mxu0 0.0
  %814 = vmatprep.subr.mxu0 0.0
  %815 = vmatpush1.msra.mxu0 0.0
  %816 = vmatprep.subr.mxu0 0.0
  %817 = vmatpush1.msra.mxu0 0.0
  %818 = vmatprep.subr.mxu0 0.0
  %819 = vmatpush1.msra.mxu0 0.0
  %820 = vmatprep.mubr.f32.mxu0 0.0
  %821 = vmatmul.mubr.f32.gmra.mrb[0].mxu0 %v683
  %v822 = vpop.f32.mrb[0].mxu0
  %v823 = vadd.f32 %v680, %v822
  %v824 = vpop.f32.mrb[0].mxu0
  %v825 = vadd.f32 %v680, %v824
  %826 = vdwg.mxu0
  %v827 = vmax.f32 %v752, 0.0
  %v828 = vmax.f32 %v754, 0.0
  %v829 = vmax.f32 %v823, 0.0
  %v830 = vmax.f32 %v825, 0.0
  %831 = vrot.lane.b32.xlu0 %v827, 17
  %v832 = vpop.permute.xlu0 %831
  %833 = vrot.lane.b32.xlu0 %v828, 17
  %v834 = vpop.permute.xlu0 %833
  %835 = vrot.lane.b32.xlu0 %v829, 17
  %v836 = vpop.permute.xlu0 %835
  %837 = vrot.lane.b32.xlu0 %v830, 17
  %v838 = vpop.permute.xlu0 %837
  %v839 = vsel %vm252, %v836, %v838
  %v840 = vsel %vm252, %v834, %v836
  %v841 = vsel %vm252, %v832, %v834
  %v842 = vsel %vm252, %v838, %v832
  %843 = vrot.lane.b32.xlu0 %v827, 16
  %v844 = vpop.permute.xlu0 %843
  %845 = vrot.lane.b32.xlu0 %v828, 16
  %v846 = vpop.permute.xlu0 %845
  %847 = vrot.lane.b32.xlu0 %v829, 16
  %v848 = vpop.permute.xlu0 %847
  %849 = vrot.lane.b32.xlu0 %v830, 16
  %v850 = vpop.permute.xlu0 %849
  %v851 = vsel %vm265, %v848, %v850
  %v852 = vsel %vm265, %v846, %v848
  %v853 = vsel %vm265, %v844, %v846
  %v854 = vsel %vm265, %v850, %v844
  %855 = vrot.lane.b32.xlu0 %v827, 15
  %v856 = vpop.permute.xlu0 %855
  %857 = vrot.lane.b32.xlu0 %v828, 15
  %v858 = vpop.permute.xlu0 %857
  %859 = vrot.lane.b32.xlu0 %v829, 15
  %v860 = vpop.permute.xlu0 %859
  %861 = vrot.lane.b32.xlu0 %v830, 15
  %v862 = vpop.permute.xlu0 %861
  %v863 = vsel %vm278, %v860, %v862
  %v864 = vsel %vm278, %v858, %v860
  %v865 = vsel %vm278, %v856, %v858
  %v866 = vsel %vm278, %v862, %v856
  %867 = vrot.lane.b32.xlu0 %v827, 1
  %v868 = vpop.permute.xlu0 %867
  %869 = vrot.lane.b32.xlu0 %v828, 1
  %v870 = vpop.permute.xlu0 %869
  %871 = vrot.lane.b32.xlu0 %v829, 1
  %v872 = vpop.permute.xlu0 %871
  %873 = vrot.lane.b32.xlu0 %v830, 1
  %v874 = vpop.permute.xlu0 %873
  %v875 = vsel %vm291, %v872, %v874
  %v876 = vsel %vm291, %v870, %v872
  %v877 = vsel %vm291, %v868, %v870
  %v878 = vsel %vm291, %v874, %v868
  %879 = vrot.lane.b32.xlu0 %v827, 127
  %v880 = vpop.permute.xlu0 %879
  %881 = vrot.lane.b32.xlu0 %v828, 127
  %v882 = vpop.permute.xlu0 %881
  %883 = vrot.lane.b32.xlu0 %v829, 127
  %v884 = vpop.permute.xlu0 %883
  %885 = vrot.lane.b32.xlu0 %v830, 127
  %v886 = vpop.permute.xlu0 %885
  %v887 = vsel %vm304, %v884, %v886
  %v888 = vsel %vm304, %v882, %v884
  %v889 = vsel %vm304, %v880, %v882
  %v890 = vsel %vm304, %v886, %v880
  %891 = vrot.lane.b32.xlu0 %v827, 113
  %v892 = vpop.permute.xlu0 %891
  %893 = vrot.lane.b32.xlu0 %v828, 113
  %v894 = vpop.permute.xlu0 %893
  %895 = vrot.lane.b32.xlu0 %v829, 113
  %v896 = vpop.permute.xlu0 %895
  %897 = vrot.lane.b32.xlu0 %v830, 113
  %v898 = vpop.permute.xlu0 %897
  %v899 = vsel %vm317, %v896, %v898
  %v900 = vsel %vm317, %v894, %v896
  %v901 = vsel %vm317, %v892, %v894
  %v902 = vsel %vm317, %v898, %v892
  %903 = vrot.lane.b32.xlu0 %v827, 112
  %v904 = vpop.permute.xlu0 %903
  %905 = vrot.lane.b32.xlu0 %v828, 112
  %v906 = vpop.permute.xlu0 %905
  %907 = vrot.lane.b32.xlu0 %v829, 112
  %v908 = vpop.permute.xlu0 %907
  %909 = vrot.lane.b32.xlu0 %v830, 112
  %v910 = vpop.permute.xlu0 %909
  %v911 = vsel %vm330, %v908, %v910
  %v912 = vsel %vm330, %v906, %v908
  %v913 = vsel %vm330, %v904, %v906
  %v914 = vsel %vm330, %v910, %v904
  %915 = vrot.lane.b32.xlu0 %v827, 111
  %v916 = vpop.permute.xlu0 %915
  %917 = vrot.lane.b32.xlu0 %v828, 111
  %v918 = vpop.permute.xlu0 %917
  %919 = vrot.lane.b32.xlu0 %v829, 111
  %v920 = vpop.permute.xlu0 %919
  %921 = vrot.lane.b32.xlu0 %v830, 111
  %v922 = vpop.permute.xlu0 %921
  %v923 = vsel %vm343, %v920, %v922
  %v924 = vsel %vm343, %v918, %v920
  %v925 = vsel %vm343, %v916, %v918
  %v926 = vsel %vm343, %v922, %v916
  %v927 = vmul.f32 %v842, %v57
  %v928 = vmul.f32 %v841, %v61
  %v929 = vmul.f32 %v840, %v65
  %v930 = vmul.f32 %v839, %v69
  %v931 = vmul.f32 %v854, %v78
  %v932 = vmul.f32 %v853, %v82
  %v933 = vmul.f32 %v852, %v86
  %v934 = vmul.f32 %v851, %v90
  %v935 = vmul.f32 %v866, %v99
  %v936 = vmul.f32 %v865, %v103
  %v937 = vmul.f32 %v864, %v107
  %v938 = vmul.f32 %v863, %v111
  %v939 = vmul.f32 %v878, %v120
  %v940 = vmul.f32 %v877, %v124
  %v941 = vmul.f32 %v876, %v128
  %v942 = vmul.f32 %v875, %v132
  %v943 = vmul.f32 %v827, %v141
  %v944 = vmul.f32 %v828, %v145
  %v945 = vmul.f32 %v829, %v149
  %v946 = vmul.f32 %v830, %v153
  %v947 = vmul.f32 %v889, %v162
  %v948 = vmul.f32 %v888, %v166
  %v949 = vmul.f32 %v887, %v170
  %v950 = vmul.f32 %v890, %v174
  %v951 = vmul.f32 %v901, %v183
  %v952 = vmul.f32 %v900, %v187
  %v953 = vmul.f32 %v899, %v191
  %v954 = vmul.f32 %v902, %v195
  %v955 = vmul.f32 %v913, %v204
  %v956 = vmul.f32 %v912, %v208
  %v957 = vmul.f32 %v911, %v212
  %v958 = vmul.f32 %v914, %v216
  %v959 = vmul.f32 %v925, %v225
  %v960 = vmul.f32 %v924, %v229
  %v961 = vmul.f32 %v923, %v233
  %v962 = vmul.f32 %v926, %v237
  %s963 = scalar_lea.vmem %s2, 16
  %v964 = vld [vmem:[%s963] sm:$0xff]
  %s965 = scalar_lea.vmem %s3, 16
  %v966 = vld [vmem:[%s965] sm:$0xff]
  %968 = vset.pattern.permute.xlu0 0
  %969 = vperm.xlu0 %968, %v966
  %v970 = vpop.permute.xlu0 %969
  %v973 = vsel %vm391, %v964, 0
  %975 = vmatprep.subr.mxu0 %v928
  %976 = vmatpush1.msra.mxu0 %v927
  %977 = vmatprep.subr.mxu0 %v932
  %978 = vmatpush1.msra.mxu0 %v931
  %979 = vmatprep.subr.mxu0 %v936
  %980 = vmatpush1.msra.mxu0 %v935
  %981 = vmatprep.subr.mxu0 %v940
  %982 = vmatpush1.msra.mxu0 %v939
  %983 = vmatprep.subr.mxu0 %v944
  %984 = vmatpush1.msra.mxu0 %v943
  %985 = vmatprep.subr.mxu0 %v948
  %986 = vmatpush1.msra.mxu0 %v947
  %987 = vmatprep.subr.mxu0 %v952
  %988 = vmatpush1.msra.mxu0 %v951
  %989 = vmatprep.subr.mxu0 %v956
  %990 = vmatpush1.msra.mxu0 %v955
  %991 = vmatprep.subr.mxu0 %v960
  %992 = vmatpush1.msra.mxu0 %v959
  %993 = vmatprep.subr.mxu0 0.0
  %994 = vmatpush1.msra.mxu0 0.0
  %995 = vmatprep.subr.mxu0 0.0
  %996 = vmatpush1.msra.mxu0 0.0
  %997 = vmatprep.subr.mxu0 0.0
  %998 = vmatpush1.msra.mxu0 0.0
  %999 = vmatprep.subr.mxu0 0.0
  %1000 = vmatpush1.msra.mxu0 0.0
  %1001 = vmatprep.subr.mxu0 0.0
  %1002 = vmatpush1.msra.mxu0 0.0
  %1003 = vmatprep.subr.mxu0 0.0
  %1004 = vmatpush1.msra.mxu0 0.0
  %1005 = vmatprep.subr.mxu0 0.0
  %1006 = vmatpush1.msra.mxu0 0.0
  %1007 = vmatprep.subr.mxu0 0.0
  %1008 = vmatpush1.msra.mxu0 0.0
  %1009 = vmatprep.subr.mxu0 0.0
  %1010 = vmatpush1.msra.mxu0 0.0
  %1011 = vmatprep.subr.mxu0 0.0
  %1012 = vmatpush1.msra.mxu0 0.0
  %1013 = vmatprep.subr.mxu0 0.0
  %1014 = vmatpush1.msra.mxu0 0.0
  %1015 = vmatprep.subr.mxu0 0.0
  %1016 = vmatpush1.msra.mxu0 0.0
  %1017 = vmatprep.subr.mxu0 0.0
  %1018 = vmatpush1.msra.mxu0 0.0
  %1019 = vmatprep.subr.mxu0 0.0
  %1020 = vmatpush1.msra.mxu0 0.0
  %1021 = vmatprep.subr.mxu0 0.0
  %1022 = vmatpush1.msra.mxu0 0.0
  %1023 = vmatprep.subr.mxu0 0.0
  %1024 = vmatpush1.msra.mxu0 0.0
  %1025 = vmatprep.subr.mxu0 0.0
  %1026 = vmatpush1.msra.mxu0 0.0
  %1027 = vmatprep.subr.mxu0 0.0
  %1028 = vmatpush1.msra.mxu0 0.0
  %1029 = vmatprep.subr.mxu0 0.0
  %1030 = vmatpush1.msra.mxu0 0.0
  %1031 = vmatprep.subr.mxu0 0.0
  %1032 = vmatpush1.msra.mxu0 0.0
  %1033 = vmatprep.subr.mxu0 0.0
  %1034 = vmatpush1.msra.mxu0 0.0
  %1035 = vmatprep.subr.mxu0 0.0
  %1036 = vmatpush1.msra.mxu0 0.0
  %1037 = vmatprep.subr.mxu0 0.0
  %1038 = vmatpush1.msra.mxu0 0.0
  %1039 = vmatprep.mubr.f32.mxu0 0.0
  %1040 = vmatmul.mubr.f32.gmra.mrb[0].mxu0 %v973
  %v1041 = vpop.f32.mrb[0].mxu0
  %v1042 = vadd.f32 %v970, %v1041
  %v1043 = vpop.f32.mrb[0].mxu0
  %v1044 = vadd.f32 %v970, %v1043
  %1045 = vdwg.mxu0
  %1046 = vmatprep.subr.mxu0 %v930
  %1047 = vmatpush1.msra.mxu0 %v929
  %1048 = vmatprep.subr.mxu0 %v934
  %1049 = vmatpush1.msra.mxu0 %v933
  %1050 = vmatprep.subr.mxu0 %v938
  %1051 = vmatpush1.msra.mxu0 %v937
  %1052 = vmatprep.subr.mxu0 %v942
  %1053 = vmatpush1.msra.mxu0 %v941
  %1054 = vmatprep.subr.mxu0 %v946
  %1055 = vmatpush1.msra.mxu0 %v945
  %1056 = vmatprep.subr.mxu0 %v950
  %1057 = vmatpush1.msra.mxu0 %v949
  %1058 = vmatprep.subr.mxu0 %v954
  %1059 = vmatpush1.msra.mxu0 %v953
  %1060 = vmatprep.subr.mxu0 %v958
  %1061 = vmatpush1.msra.mxu0 %v957
  %1062 = vmatprep.subr.mxu0 %v962
  %1063 = vmatpush1.msra.mxu0 %v961
  %1064 = vmatprep.subr.mxu0 0.0
  %1065 = vmatpush1.msra.mxu0 0.0
  %1066 = vmatprep.subr.mxu0 0.0
  %1067 = vmatpush1.msra.mxu0 0.0
  %1068 = vmatprep.subr.mxu0 0.0
  %1069 = vmatpush1.msra.mxu0 0.0
  %1070 = vmatprep.subr.mxu0 0.0
  %1071 = vmatpush1.msra.mxu0 0.0
  %1072 = vmatprep.subr.mxu0 0.0
  %1073 = vmatpush1.msra.mxu0 0.0
  %1074 = vmatprep.subr.mxu0 0.0
  %1075 = vmatpush1.msra.mxu0 0.0
  %1076 = vmatprep.subr.mxu0 0.0
  %1077 = vmatpush1.msra.mxu0 0.0
  %1078 = vmatprep.subr.mxu0 0.0
  %1079 = vmatpush1.msra.mxu0 0.0
  %1080 = vmatprep.subr.mxu0 0.0
  %1081 = vmatpush1.msra.mxu0 0.0
  %1082 = vmatprep.subr.mxu0 0.0
  %1083 = vmatpush1.msra.mxu0 0.0
  %1084 = vmatprep.subr.mxu0 0.0
  %1085 = vmatpush1.msra.mxu0 0.0
  %1086 = vmatprep.subr.mxu0 0.0
  %1087 = vmatpush1.msra.mxu0 0.0
  %1088 = vmatprep.subr.mxu0 0.0
  %1089 = vmatpush1.msra.mxu0 0.0
  %1090 = vmatprep.subr.mxu0 0.0
  %1091 = vmatpush1.msra.mxu0 0.0
  %1092 = vmatprep.subr.mxu0 0.0
  %1093 = vmatpush1.msra.mxu0 0.0
  %1094 = vmatprep.subr.mxu0 0.0
  %1095 = vmatpush1.msra.mxu0 0.0
  %1096 = vmatprep.subr.mxu0 0.0
  %1097 = vmatpush1.msra.mxu0 0.0
  %1098 = vmatprep.subr.mxu0 0.0
  %1099 = vmatpush1.msra.mxu0 0.0
  %1100 = vmatprep.subr.mxu0 0.0
  %1101 = vmatpush1.msra.mxu0 0.0
  %1102 = vmatprep.subr.mxu0 0.0
  %1103 = vmatpush1.msra.mxu0 0.0
  %1104 = vmatprep.subr.mxu0 0.0
  %1105 = vmatpush1.msra.mxu0 0.0
  %1106 = vmatprep.subr.mxu0 0.0
  %1107 = vmatpush1.msra.mxu0 0.0
  %1108 = vmatprep.subr.mxu0 0.0
  %1109 = vmatpush1.msra.mxu0 0.0
  %1110 = vmatprep.mubr.f32.mxu0 0.0
  %1111 = vmatmul.mubr.f32.gmra.mrb[0].mxu0 %v973
  %v1112 = vpop.f32.mrb[0].mxu0
  %v1113 = vadd.f32 %v970, %v1112
  %v1114 = vpop.f32.mrb[0].mxu0
  %v1115 = vadd.f32 %v970, %v1114
  %1116 = vdwg.mxu0
  %v1121 = vcombine.low %v1042, %v1044
  %v1122 = vcombine.low %v1113, %v1115
  %v1124 = vunpack.c.l.s4 1966171168
  %v1125 = vunpack.c.0.s8 %v1124
  %v1126 = vlaneseq
  %v1127 = vshrl.u32 %v1126, 7
  %v1128 = vsub.s32 %v1125, %v1127
  %v1129 = vrot.slane %v1121, %v1128
  %v1131 = vunpack.c.l.s4 1966171168
  %v1132 = vunpack.c.0.s8 %v1131
  %v1133 = vlaneseq
  %v1134 = vshrl.u32 %v1133, 7
  %v1135 = vsub.s32 %v1132, %v1134
  %v1136 = vrot.slane %v1122, %v1135
  %v1137 = vcombine.low %v1129, %v1136
  %v1139 = vunpack.c.l.s4 1966171168
  %v1140 = vunpack.c.0.s8 %v1139
  %v1141 = vlaneseq
  %v1142 = vshrl.u32 %v1141, 7
  %v1143 = vsub.s32 %v1140, %v1142
  %v1144 = vrot.slane %v1137, %v1143
  %v1146 = vlaneseq
  %vm1147 = vcmp.ge.s32.totalorder %v1146, 0
  %vm1148 = vcmp.lt.s32.totalorder %v1146, 512
  %vm1149 = vmand %vm1147, %vm1148
  %1150 = vst.msk [vmem:[%s4] sm:$0xf] %vm1149, %v1144
  // Predicated region
  $region18: #{xpdnet_block2_forward.2} parent=0 // pred_check
    _
  $region19: #{xpdnet_block2_forward.2} parent=0 // pred_check_branch
    %1152 = sbr.rel (0) target = $region21
  $region20: #{xpdnet_block2_forward.2} parent=0 // pred_region
    _
  $region21: #{xpdnet_block2_forward.2} parent=0 // pred_fallthru
    _
  // Predicated region
  $region22: #{xpdnet_block2_forward.2} parent=0 // pred_check
    _
  $region23: #{xpdnet_block2_forward.2} parent=0 // pred_check_branch
    %1154 = sbr.rel (0) target = $region25
  $region24: #{xpdnet_block2_forward.2} parent=0 // pred_region
    _
  $region25: #{xpdnet_block2_forward.2} parent=0 // pred_fallthru
    _

// kernel: xpdnet_block2_forward.3
$region0: #{xpdnet_block2_forward.3}
  #allocation0 [shape = 'u32[]', space=smem, size = 0x4, offset = 0x4, fixed_abs, tag = 'smem constant byte address 0x4 - core index']
  #allocation1 [shape = 'u32[144,128]{1,0:T(1,128)}', space=vmem, size = 0x12000, scoped, tag = 'internal scratch']
  #allocation2 [shape = 'f32[1,1]{1,0:T(1,128)S(6)}', space=smem, size = 0x200, scoped, tag = 'scoped memory for xpdnet_block2_forward.3']
  %s0 = inlined_call_operand.vmem [shape: f32[1,2,512], index: 0, kind: input, shape index: {}]
  %s1 = inlined_call_operand.vmem [shape: f32[9,1,512], index: 1, kind: input, shape index: {}]
  %s2 = inlined_call_operand.vmem [shape: f32[3,8,72], index: 2, kind: input, shape index: {}]
  %s3 = inlined_call_operand.vmem [shape: f32[3,8,1], index: 3, kind: input, shape index: {}]
  %s4 = inlined_call_operand.vmem [shape: f32[1,2,512], index: 4, kind: input, shape index: {}]
  %s5 = inlined_call_operand.<no memory space> [shape: f32[1,1], index: 5, kind: input, shape index: {}]
  %s6 = inlined_call_operand.vmem [shape: f32[1,2,512], index: 6, kind: output, shape index: {}]
  %s7 = sld [smem:[#allocation0]]
  $region34: #{xpdnet_block2_forward.3} parent=0
    _
  %s9 = ssub.s32 1, %s7
  %s10 = scalar_select 0, %s9, %s7
  %11 = sst [smem:[#allocation2]] %s5
  // Predicated region
  $region2: #{xpdnet_block2_forward.3} parent=0 // pred_check
    _
  $region3: #{xpdnet_block2_forward.3} parent=0 // pred_check_branch
    %13 = sbr.rel (0) target = $region5
  $region4: #{xpdnet_block2_forward.3} parent=0 // pred_region
    _
  $region5: #{xpdnet_block2_forward.3} parent=0 // pred_fallthru
    _
  // Predicated region
  $region6: #{xpdnet_block2_forward.3} parent=0 // pred_check
    _
  $region7: #{xpdnet_block2_forward.3} parent=0 // pred_check_branch
    %15 = sbr.rel (0) target = $region9
  $region8: #{xpdnet_block2_forward.3} parent=0 // pred_region
    _
  $region9: #{xpdnet_block2_forward.3} parent=0 // pred_fallthru
    _
  // Predicated region
  $region10: #{xpdnet_block2_forward.3} parent=0 // pred_check
    _
  $region11: #{xpdnet_block2_forward.3} parent=0 // pred_check_branch
    %17 = sbr.rel (0) target = $region13
  $region12: #{xpdnet_block2_forward.3} parent=0 // pred_region
    _
  $region13: #{xpdnet_block2_forward.3} parent=0 // pred_fallthru
    _
  // Predicated region
  $region14: #{xpdnet_block2_forward.3} parent=0 // pred_check
    _
  $region15: #{xpdnet_block2_forward.3} parent=0 // pred_check_branch
    %19 = sbr.rel (0) target = $region17
  $region16: #{xpdnet_block2_forward.3} parent=0 // pred_region
    _
  $region17: #{xpdnet_block2_forward.3} parent=0 // pred_fallthru
    _
  // Predicated region
  $region18: #{xpdnet_block2_forward.3} parent=0 // pred_check
    _
  $region19: #{xpdnet_block2_forward.3} parent=0 // pred_check_branch
    %21 = sbr.rel (0) target = $region21
  $region20: #{xpdnet_block2_forward.3} parent=0 // pred_region
    _
  $region21: #{xpdnet_block2_forward.3} parent=0 // pred_fallthru
    _
  // Predicated region
  $region22: #{xpdnet_block2_forward.3} parent=0 // pred_check
    _
  $region23: #{xpdnet_block2_forward.3} parent=0 // pred_check_branch
    %23 = sbr.rel (0) target = $region25
  $region24: #{xpdnet_block2_forward.3} parent=0 // pred_region
    _
  $region25: #{xpdnet_block2_forward.3} parent=0 // pred_fallthru
    _
  %v24 = vld [vmem:[%s0] sm:$0xff]
  %v26 = vcombine.high %v24, %v24
  %v28 = vunpack.c.l.s4 1983009808
  %v29 = vunpack.c.0.s8 %v28
  %v30 = vlaneseq
  %v31 = vshrl.u32 %v30, 7
  %v32 = vsub.s32 %v29, %v31
  %v33 = vrot.slane %v24, %v32
  %v35 = vunpack.c.l.s4 1983009808
  %v36 = vunpack.c.0.s8 %v35
  %v37 = vlaneseq
  %v38 = vshrl.u32 %v37, 7
  %v39 = vsub.s32 %v36, %v38
  %v40 = vrot.slane %v26, %v39
  %v41 = vcombine.high %v33, %v33
  %v42 = vcombine.high %v40, %v40
  %vm47 = vcmask 1041408
  %v48 = vsel %vm47, %v33, 0.0
  %v49 = vsel %vm47, %v41, 0.0
  %v50 = vsel %vm47, %v40, 0.0
  %v51 = vsel %vm47, %v42, 0.0
  %v52 = vld [vmem:[%s1] sm:$0xf]
  %v53 = vld [vmem:[%s1 + $0x4] sm:$0xf]
  %v54 = vld [vmem:[%s1 + $0x8] sm:$0xf]
  %v55 = vld [vmem:[%s1 + $0xc] sm:$0xf]
  %v56 = vld [vmem:[%s1 + $0x10] sm:$0xf]
  %v57 = vld [vmem:[%s1 + $0x14] sm:$0xf]
  %v58 = vld [vmem:[%s1 + $0x18] sm:$0xf]
  %v59 = vld [vmem:[%s1 + $0x1c] sm:$0xf]
  %v60 = vld [vmem:[%s1 + $0x20] sm:$0xf]
  %v62 = vlaneseq
  %v63 = vshrl.u32 %v62, 7
  %v64 = vsub.s32 0, %v63
  %v65 = vrot.slane %v52, %v64
  %v66 = vlaneseq
  %v67 = vshrl.u32 %v66, 7
  %v68 = vsub.s32 1, %v67
  %v69 = vrot.slane %v52, %v68
  %v70 = vlaneseq
  %v71 = vshrl.u32 %v70, 7
  %v72 = vsub.s32 2, %v71
  %v73 = vrot.slane %v52, %v72
  %v74 = vlaneseq
  %v75 = vshrl.u32 %v74, 7
  %v76 = vsub.s32 3, %v75
  %v77 = vrot.slane %v52, %v76
  %v83 = vlaneseq
  %v84 = vshrl.u32 %v83, 7
  %v85 = vsub.s32 0, %v84
  %v86 = vrot.slane %v53, %v85
  %v87 = vlaneseq
  %v88 = vshrl.u32 %v87, 7
  %v89 = vsub.s32 1, %v88
  %v90 = vrot.slane %v53, %v89
  %v91 = vlaneseq
  %v92 = vshrl.u32 %v91, 7
  %v93 = vsub.s32 2, %v92
  %v94 = vrot.slane %v53, %v93
  %v95 = vlaneseq
  %v96 = vshrl.u32 %v95, 7
  %v97 = vsub.s32 3, %v96
  %v98 = vrot.slane %v53, %v97
  %v104 = vlaneseq
  %v105 = vshrl.u32 %v104, 7
  %v106 = vsub.s32 0, %v105
  %v107 = vrot.slane %v54, %v106
  %v108 = vlaneseq
  %v109 = vshrl.u32 %v108, 7
  %v110 = vsub.s32 1, %v109
  %v111 = vrot.slane %v54, %v110
  %v112 = vlaneseq
  %v113 = vshrl.u32 %v112, 7
  %v114 = vsub.s32 2, %v113
  %v115 = vrot.slane %v54, %v114
  %v116 = vlaneseq
  %v117 = vshrl.u32 %v116, 7
  %v118 = vsub.s32 3, %v117
  %v119 = vrot.slane %v54, %v118
  %v125 = vlaneseq
  %v126 = vshrl.u32 %v125, 7
  %v127 = vsub.s32 0, %v126
  %v128 = vrot.slane %v55, %v127
  %v129 = vlaneseq
  %v130 = vshrl.u32 %v129, 7
  %v131 = vsub.s32 1, %v130
  %v132 = vrot.slane %v55, %v131
  %v133 = vlaneseq
  %v134 = vshrl.u32 %v133, 7
  %v135 = vsub.s32 2, %v134
  %v136 = vrot.slane %v55, %v135
  %v137 = vlaneseq
  %v138 = vshrl.u32 %v137, 7
  %v139 = vsub.s32 3, %v138
  %v140 = vrot.slane %v55, %v139
  %v146 = vlaneseq
  %v147 = vshrl.u32 %v146, 7
  %v148 = vsub.s32 0, %v147
  %v149 = vrot.slane %v56, %v148
  %v150 = vlaneseq
  %v151 = vshrl.u32 %v150, 7
  %v152 = vsub.s32 1, %v151
  %v153 = vrot.slane %v56, %v152
  %v154 = vlaneseq
  %v155 = vshrl.u32 %v154, 7
  %v156 = vsub.s32 2, %v155
  %v157 = vrot.slane %v56, %v156
  %v158 = vlaneseq
  %v159 = vshrl.u32 %v158, 7
  %v160 = vsub.s32 3, %v159
  %v161 = vrot.slane %v56, %v160
  %v167 = vlaneseq
  %v168 = vshrl.u32 %v167, 7
  %v169 = vsub.s32 0, %v168
  %v170 = vrot.slane %v57, %v169
  %v171 = vlaneseq
  %v172 = vshrl.u32 %v171, 7
  %v173 = vsub.s32 1, %v172
  %v174 = vrot.slane %v57, %v173
  %v175 = vlaneseq
  %v176 = vshrl.u32 %v175, 7
  %v177 = vsub.s32 2, %v176
  %v178 = vrot.slane %v57, %v177
  %v179 = vlaneseq
  %v180 = vshrl.u32 %v179, 7
  %v181 = vsub.s32 3, %v180
  %v182 = vrot.slane %v57, %v181
  %v188 = vlaneseq
  %v189 = vshrl.u32 %v188, 7
  %v190 = vsub.s32 0, %v189
  %v191 = vrot.slane %v58, %v190
  %v192 = vlaneseq
  %v193 = vshrl.u32 %v192, 7
  %v194 = vsub.s32 1, %v193
  %v195 = vrot.slane %v58, %v194
  %v196 = vlaneseq
  %v197 = vshrl.u32 %v196, 7
  %v198 = vsub.s32 2, %v197
  %v199 = vrot.slane %v58, %v198
  %v200 = vlaneseq
  %v201 = vshrl.u32 %v200, 7
  %v202 = vsub.s32 3, %v201
  %v203 = vrot.slane %v58, %v202
  %v209 = vlaneseq
  %v210 = vshrl.u32 %v209, 7
  %v211 = vsub.s32 0, %v210
  %v212 = vrot.slane %v59, %v211
  %v213 = vlaneseq
  %v214 = vshrl.u32 %v213, 7
  %v215 = vsub.s32 1, %v214
  %v216 = vrot.slane %v59, %v215
  %v217 = vlaneseq
  %v218 = vshrl.u32 %v217, 7
  %v219 = vsub.s32 2, %v218
  %v220 = vrot.slane %v59, %v219
  %v221 = vlaneseq
  %v222 = vshrl.u32 %v221, 7
  %v223 = vsub.s32 3, %v222
  %v224 = vrot.slane %v59, %v223
  %v230 = vlaneseq
  %v231 = vshrl.u32 %v230, 7
  %v232 = vsub.s32 0, %v231
  %v233 = vrot.slane %v60, %v232
  %v234 = vlaneseq
  %v235 = vshrl.u32 %v234, 7
  %v236 = vsub.s32 1, %v235
  %v237 = vrot.slane %v60, %v236
  %v238 = vlaneseq
  %v239 = vshrl.u32 %v238, 7
  %v240 = vsub.s32 2, %v239
  %v241 = vrot.slane %v60, %v240
  %v242 = vlaneseq
  %v243 = vshrl.u32 %v242, 7
  %v244 = vsub.s32 3, %v243
  %v245 = vrot.slane %v60, %v244
  %250 = vrot.lane.b32.xlu0 %v48, 17
  %v251 = vpop.permute.xlu0 %250
  %252 = vrot.lane.b32.xlu0 %v49, 17
  %v253 = vpop.permute.xlu0 %252
  %254 = vrot.lane.b32.xlu0 %v50, 17
  %v255 = vpop.permute.xlu0 %254
  %256 = vrot.lane.b32.xlu0 %v51, 17
  %v257 = vpop.permute.xlu0 %256
  %v258 = vlaneseq
  %v259 = vand.u32 %v258, 127
  %vm260 = vcmp.lt.s32.totalorder %v259, 17
  %v261 = vsel %vm260, %v255, %v257
  %v262 = vsel %vm260, %v253, %v255
  %v263 = vsel %vm260, %v251, %v253
  %v264 = vsel %vm260, %v257, %v251
  %265 = vrot.lane.b32.xlu0 %v48, 16
  %v266 = vpop.permute.xlu0 %265
  %267 = vrot.lane.b32.xlu0 %v49, 16
  %v268 = vpop.permute.xlu0 %267
  %269 = vrot.lane.b32.xlu0 %v50, 16
  %v270 = vpop.permute.xlu0 %269
  %271 = vrot.lane.b32.xlu0 %v51, 16
  %v272 = vpop.permute.xlu0 %271
  %vm273 = vcmp.lt.s32.totalorder %v259, 16
  %v274 = vsel %vm273, %v270, %v272
  %v275 = vsel %vm273, %v268, %v270
  %v276 = vsel %vm273, %v266, %v268
  %v277 = vsel %vm273, %v272, %v266
  %278 = vrot.lane.b32.xlu0 %v48, 15
  %v279 = vpop.permute.xlu0 %278
  %280 = vrot.lane.b32.xlu0 %v49, 15
  %v281 = vpop.permute.xlu0 %280
  %282 = vrot.lane.b32.xlu0 %v50, 15
  %v283 = vpop.permute.xlu0 %282
  %284 = vrot.lane.b32.xlu0 %v51, 15
  %v285 = vpop.permute.xlu0 %284
  %vm286 = vcmp.lt.s32.totalorder %v259, 15
  %v287 = vsel %vm286, %v283, %v285
  %v288 = vsel %vm286, %v281, %v283
  %v289 = vsel %vm286, %v279, %v281
  %v290 = vsel %vm286, %v285, %v279
  %291 = vrot.lane.b32.xlu0 %v48, 1
  %v292 = vpop.permute.xlu0 %291
  %293 = vrot.lane.b32.xlu0 %v49, 1
  %v294 = vpop.permute.xlu0 %293
  %295 = vrot.lane.b32.xlu0 %v50, 1
  %v296 = vpop.permute.xlu0 %295
  %297 = vrot.lane.b32.xlu0 %v51, 1
  %v298 = vpop.permute.xlu0 %297
  %vm299 = vcmp.lt.s32.totalorder %v259, 1
  %v300 = vsel %vm299, %v296, %v298
  %v301 = vsel %vm299, %v294, %v296
  %v302 = vsel %vm299, %v292, %v294
  %v303 = vsel %vm299, %v298, %v292
  %304 = vrot.lane.b32.xlu0 %v48, 127
  %v305 = vpop.permute.xlu0 %304
  %306 = vrot.lane.b32.xlu0 %v49, 127
  %v307 = vpop.permute.xlu0 %306
  %308 = vrot.lane.b32.xlu0 %v50, 127
  %v309 = vpop.permute.xlu0 %308
  %310 = vrot.lane.b32.xlu0 %v51, 127
  %v311 = vpop.permute.xlu0 %310
  %vm312 = vcmp.lt.s32.totalorder %v259, 127
  %v313 = vsel %vm312, %v309, %v311
  %v314 = vsel %vm312, %v307, %v309
  %v315 = vsel %vm312, %v305, %v307
  %v316 = vsel %vm312, %v311, %v305
  %317 = vrot.lane.b32.xlu0 %v48, 113
  %v318 = vpop.permute.xlu0 %317
  %319 = vrot.lane.b32.xlu0 %v49, 113
  %v320 = vpop.permute.xlu0 %319
  %321 = vrot.lane.b32.xlu0 %v50, 113
  %v322 = vpop.permute.xlu0 %321
  %323 = vrot.lane.b32.xlu0 %v51, 113
  %v324 = vpop.permute.xlu0 %323
  %vm325 = vcmp.lt.s32.totalorder %v259, 113
  %v326 = vsel %vm325, %v322, %v324
  %v327 = vsel %vm325, %v320, %v322
  %v328 = vsel %vm325, %v318, %v320
  %v329 = vsel %vm325, %v324, %v318
  %330 = vrot.lane.b32.xlu0 %v48, 112
  %v331 = vpop.permute.xlu0 %330
  %332 = vrot.lane.b32.xlu0 %v49, 112
  %v333 = vpop.permute.xlu0 %332
  %334 = vrot.lane.b32.xlu0 %v50, 112
  %v335 = vpop.permute.xlu0 %334
  %336 = vrot.lane.b32.xlu0 %v51, 112
  %v337 = vpop.permute.xlu0 %336
  %vm338 = vcmp.lt.s32.totalorder %v259, 112
  %v339 = vsel %vm338, %v335, %v337
  %v340 = vsel %vm338, %v333, %v335
  %v341 = vsel %vm338, %v331, %v333
  %v342 = vsel %vm338, %v337, %v331
  %343 = vrot.lane.b32.xlu0 %v48, 111
  %v344 = vpop.permute.xlu0 %343
  %345 = vrot.lane.b32.xlu0 %v49, 111
  %v346 = vpop.permute.xlu0 %345
  %347 = vrot.lane.b32.xlu0 %v50, 111
  %v348 = vpop.permute.xlu0 %347
  %349 = vrot.lane.b32.xlu0 %v51, 111
  %v350 = vpop.permute.xlu0 %349
  %vm351 = vcmp.lt.s32.totalorder %v259, 111
  %v352 = vsel %vm351, %v348, %v350
  %v353 = vsel %vm351, %v346, %v348
  %v354 = vsel %vm351, %v344, %v346
  %v355 = vsel %vm351, %v350, %v344
  %v356 = vmul.f32 %v264, %v65
  %v357 = vmul.f32 %v263, %v69
  %v358 = vmul.f32 %v262, %v73
  %v359 = vmul.f32 %v261, %v77
  %v360 = vmul.f32 %v277, %v86
  %v361 = vmul.f32 %v276, %v90
  %v362 = vmul.f32 %v275, %v94
  %v363 = vmul.f32 %v274, %v98
  %v364 = vmul.f32 %v290, %v107
  %v365 = vmul.f32 %v289, %v111
  %v366 = vmul.f32 %v288, %v115
  %v367 = vmul.f32 %v287, %v119
  %v368 = vmul.f32 %v303, %v128
  %v369 = vmul.f32 %v302, %v132
  %v370 = vmul.f32 %v301, %v136
  %v371 = vmul.f32 %v300, %v140
  %v372 = vmul.f32 %v48, %v149
  %v373 = vmul.f32 %v49, %v153
  %v374 = vmul.f32 %v50, %v157
  %v375 = vmul.f32 %v51, %v161
  %v376 = vmul.f32 %v315, %v170
  %v377 = vmul.f32 %v314, %v174
  %v378 = vmul.f32 %v313, %v178
  %v379 = vmul.f32 %v316, %v182
  %v380 = vmul.f32 %v328, %v191
  %v381 = vmul.f32 %v327, %v195
  %v382 = vmul.f32 %v326, %v199
  %v383 = vmul.f32 %v329, %v203
  %v384 = vmul.f32 %v341, %v212
  %v385 = vmul.f32 %v340, %v216
  %v386 = vmul.f32 %v339, %v220
  %v387 = vmul.f32 %v342, %v224
  %v388 = vmul.f32 %v354, %v233
  %v389 = vmul.f32 %v353, %v237
  %v390 = vmul.f32 %v352, %v241
  %v391 = vmul.f32 %v355, %v245
  %v392 = vld [vmem:[%s2] sm:$0xff]
  %v393 = vld [vmem:[%s3] sm:$0xff]
  %395 = vset.pattern.permute.xlu0 0
  %396 = vperm.xlu0 %395, %v393
  %v397 = vpop.permute.xlu0 %396
  %vm399 = vcmask 588800
  %v401 = vsel %vm399, %v392, 0
  %403 = vmatprep.subr.mxu0 %v357
  %404 = vmatpush1.msra.mxu0 %v356
  %405 = vmatprep.subr.mxu0 %v361
  %406 = vmatpush1.msra.mxu0 %v360
  %407 = vmatprep.subr.mxu0 %v365
  %408 = vmatpush1.msra.mxu0 %v364
  %409 = vmatprep.subr.mxu0 %v369
  %410 = vmatpush1.msra.mxu0 %v368
  %411 = vmatprep.subr.mxu0 %v373
  %412 = vmatpush1.msra.mxu0 %v372
  %413 = vmatprep.subr.mxu0 %v377
  %414 = vmatpush1.msra.mxu0 %v376
  %415 = vmatprep.subr.mxu0 %v381
  %416 = vmatpush1.msra.mxu0 %v380
  %417 = vmatprep.subr.mxu0 %v385
  %418 = vmatpush1.msra.mxu0 %v384
  %419 = vmatprep.subr.mxu0 %v389
  %420 = vmatpush1.msra.mxu0 %v388
  %421 = vmatprep.subr.mxu0 0.0
  %422 = vmatpush1.msra.mxu0 0.0
  %423 = vmatprep.subr.mxu0 0.0
  %424 = vmatpush1.msra.mxu0 0.0
  %425 = vmatprep.subr.mxu0 0.0
  %426 = vmatpush1.msra.mxu0 0.0
  %427 = vmatprep.subr.mxu0 0.0
  %428 = vmatpush1.msra.mxu0 0.0
  %429 = vmatprep.subr.mxu0 0.0
  %430 = vmatpush1.msra.mxu0 0.0
  %431 = vmatprep.subr.mxu0 0.0
  %432 = vmatpush1.msra.mxu0 0.0
  %433 = vmatprep.subr.mxu0 0.0
  %434 = vmatpush1.msra.mxu0 0.0
  %435 = vmatprep.subr.mxu0 0.0
  %436 = vmatpush1.msra.mxu0 0.0
  %437 = vmatprep.subr.mxu0 0.0
  %438 = vmatpush1.msra.mxu0 0.0
  %439 = vmatprep.subr.mxu0 0.0
  %440 = vmatpush1.msra.mxu0 0.0
  %441 = vmatprep.subr.mxu0 0.0
  %442 = vmatpush1.msra.mxu0 0.0
  %443 = vmatprep.subr.mxu0 0.0
  %444 = vmatpush1.msra.mxu0 0.0
  %445 = vmatprep.subr.mxu0 0.0
  %446 = vmatpush1.msra.mxu0 0.0
  %447 = vmatprep.subr.mxu0 0.0
  %448 = vmatpush1.msra.mxu0 0.0
  %449 = vmatprep.subr.mxu0 0.0
  %450 = vmatpush1.msra.mxu0 0.0
  %451 = vmatprep.subr.mxu0 0.0
  %452 = vmatpush1.msra.mxu0 0.0
  %453 = vmatprep.subr.mxu0 0.0
  %454 = vmatpush1.msra.mxu0 0.0
  %455 = vmatprep.subr.mxu0 0.0
  %456 = vmatpush1.msra.mxu0 0.0
  %457 = vmatprep.subr.mxu0 0.0
  %458 = vmatpush1.msra.mxu0 0.0
  %459 = vmatprep.subr.mxu0 0.0
  %460 = vmatpush1.msra.mxu0 0.0
  %461 = vmatprep.subr.mxu0 0.0
  %462 = vmatpush1.msra.mxu0 0.0
  %463 = vmatprep.subr.mxu0 0.0
  %464 = vmatpush1.msra.mxu0 0.0
  %465 = vmatprep.subr.mxu0 0.0
  %466 = vmatpush1.msra.mxu0 0.0
  %467 = vmatprep.mubr.f32.mxu0 0.0
  %468 = vmatmul.mubr.f32.gmra.mrb[0].mxu0 %v401
  %v469 = vpop.f32.mrb[0].mxu0
  %v470 = vadd.f32 %v397, %v469
  %v471 = vpop.f32.mrb[0].mxu0
  %v472 = vadd.f32 %v397, %v471
  %473 = vdwg.mxu0
  %474 = vmatprep.subr.mxu0 %v359
  %475 = vmatpush1.msra.mxu0 %v358
  %476 = vmatprep.subr.mxu0 %v363
  %477 = vmatpush1.msra.mxu0 %v362
  %478 = vmatprep.subr.mxu0 %v367
  %479 = vmatpush1.msra.mxu0 %v366
  %480 = vmatprep.subr.mxu0 %v371
  %481 = vmatpush1.msra.mxu0 %v370
  %482 = vmatprep.subr.mxu0 %v375
  %483 = vmatpush1.msra.mxu0 %v374
  %484 = vmatprep.subr.mxu0 %v379
  %485 = vmatpush1.msra.mxu0 %v378
  %486 = vmatprep.subr.mxu0 %v383
  %487 = vmatpush1.msra.mxu0 %v382
  %488 = vmatprep.subr.mxu0 %v387
  %489 = vmatpush1.msra.mxu0 %v386
  %490 = vmatprep.subr.mxu0 %v391
  %491 = vmatpush1.msra.mxu0 %v390
  %492 = vmatprep.subr.mxu0 0.0
  %493 = vmatpush1.msra.mxu0 0.0
  %494 = vmatprep.subr.mxu0 0.0
  %495 = vmatpush1.msra.mxu0 0.0
  %496 = vmatprep.subr.mxu0 0.0
  %497 = vmatpush1.msra.mxu0 0.0
  %498 = vmatprep.subr.mxu0 0.0
  %499 = vmatpush1.msra.mxu0 0.0
  %500 = vmatprep.subr.mxu0 0.0
  %501 = vmatpush1.msra.mxu0 0.0
  %502 = vmatprep.subr.mxu0 0.0
  %503 = vmatpush1.msra.mxu0 0.0
  %504 = vmatprep.subr.mxu0 0.0
  %505 = vmatpush1.msra.mxu0 0.0
  %506 = vmatprep.subr.mxu0 0.0
  %507 = vmatpush1.msra.mxu0 0.0
  %508 = vmatprep.subr.mxu0 0.0
  %509 = vmatpush1.msra.mxu0 0.0
  %510 = vmatprep.subr.mxu0 0.0
  %511 = vmatpush1.msra.mxu0 0.0
  %512 = vmatprep.subr.mxu0 0.0
  %513 = vmatpush1.msra.mxu0 0.0
  %514 = vmatprep.subr.mxu0 0.0
  %515 = vmatpush1.msra.mxu0 0.0
  %516 = vmatprep.subr.mxu0 0.0
  %517 = vmatpush1.msra.mxu0 0.0
  %518 = vmatprep.subr.mxu0 0.0
  %519 = vmatpush1.msra.mxu0 0.0
  %520 = vmatprep.subr.mxu0 0.0
  %521 = vmatpush1.msra.mxu0 0.0
  %522 = vmatprep.subr.mxu0 0.0
  %523 = vmatpush1.msra.mxu0 0.0
  %524 = vmatprep.subr.mxu0 0.0
  %525 = vmatpush1.msra.mxu0 0.0
  %526 = vmatprep.subr.mxu0 0.0
  %527 = vmatpush1.msra.mxu0 0.0
  %528 = vmatprep.subr.mxu0 0.0
  %529 = vmatpush1.msra.mxu0 0.0
  %530 = vmatprep.subr.mxu0 0.0
  %531 = vmatpush1.msra.mxu0 0.0
  %532 = vmatprep.subr.mxu0 0.0
  %533 = vmatpush1.msra.mxu0 0.0
  %534 = vmatprep.subr.mxu0 0.0
  %535 = vmatpush1.msra.mxu0 0.0
  %536 = vmatprep.subr.mxu0 0.0
  %537 = vmatpush1.msra.mxu0 0.0
  %538 = vmatprep.mubr.f32.mxu0 0.0
  %539 = vmatmul.mubr.f32.gmra.mrb[0].mxu0 %v401
  %v540 = vpop.f32.mrb[0].mxu0
  %v541 = vadd.f32 %v397, %v540
  %v542 = vpop.f32.mrb[0].mxu0
  %v543 = vadd.f32 %v397, %v542
  %544 = vdwg.mxu0
  %v545 = vmax.f32 %v470, 0.0
  %v546 = vmax.f32 %v472, 0.0
  %v547 = vmax.f32 %v541, 0.0
  %v548 = vmax.f32 %v543, 0.0
  %549 = vrot.lane.b32.xlu0 %v545, 17
  %v550 = vpop.permute.xlu0 %549
  %551 = vrot.lane.b32.xlu0 %v546, 17
  %v552 = vpop.permute.xlu0 %551
  %553 = vrot.lane.b32.xlu0 %v547, 17
  %v554 = vpop.permute.xlu0 %553
  %555 = vrot.lane.b32.xlu0 %v548, 17
  %v556 = vpop.permute.xlu0 %555
  %v557 = vsel %vm260, %v554, %v556
  %v558 = vsel %vm260, %v552, %v554
  %v559 = vsel %vm260, %v550, %v552
  %v560 = vsel %vm260, %v556, %v550
  %561 = vrot.lane.b32.xlu0 %v545, 16
  %v562 = vpop.permute.xlu0 %561
  %563 = vrot.lane.b32.xlu0 %v546, 16
  %v564 = vpop.permute.xlu0 %563
  %565 = vrot.lane.b32.xlu0 %v547, 16
  %v566 = vpop.permute.xlu0 %565
  %567 = vrot.lane.b32.xlu0 %v548, 16
  %v568 = vpop.permute.xlu0 %567
  %v569 = vsel %vm273, %v566, %v568
  %v570 = vsel %vm273, %v564, %v566
  %v571 = vsel %vm273, %v562, %v564
  %v572 = vsel %vm273, %v568, %v562
  %573 = vrot.lane.b32.xlu0 %v545, 15
  %v574 = vpop.permute.xlu0 %573
  %575 = vrot.lane.b32.xlu0 %v546, 15
  %v576 = vpop.permute.xlu0 %575
  %577 = vrot.lane.b32.xlu0 %v547, 15
  %v578 = vpop.permute.xlu0 %577
  %579 = vrot.lane.b32.xlu0 %v548, 15
  %v580 = vpop.permute.xlu0 %579
  %v581 = vsel %vm286, %v578, %v580
  %v582 = vsel %vm286, %v576, %v578
  %v583 = vsel %vm286, %v574, %v576
  %v584 = vsel %vm286, %v580, %v574
  %585 = vrot.lane.b32.xlu0 %v545, 1
  %v586 = vpop.permute.xlu0 %585
  %587 = vrot.lane.b32.xlu0 %v546, 1
  %v588 = vpop.permute.xlu0 %587
  %589 = vrot.lane.b32.xlu0 %v547, 1
  %v590 = vpop.permute.xlu0 %589
  %591 = vrot.lane.b32.xlu0 %v548, 1
  %v592 = vpop.permute.xlu0 %591
  %v593 = vsel %vm299, %v590, %v592
  %v594 = vsel %vm299, %v588, %v590
  %v595 = vsel %vm299, %v586, %v588
  %v596 = vsel %vm299, %v592, %v586
  %597 = vrot.lane.b32.xlu0 %v545, 127
  %v598 = vpop.permute.xlu0 %597
  %599 = vrot.lane.b32.xlu0 %v546, 127
  %v600 = vpop.permute.xlu0 %599
  %601 = vrot.lane.b32.xlu0 %v547, 127
  %v602 = vpop.permute.xlu0 %601
  %603 = vrot.lane.b32.xlu0 %v548, 127
  %v604 = vpop.permute.xlu0 %603
  %v605 = vsel %vm312, %v602, %v604
  %v606 = vsel %vm312, %v600, %v602
  %v607 = vsel %vm312, %v598, %v600
  %v608 = vsel %vm312, %v604, %v598
  %609 = vrot.lane.b32.xlu0 %v545, 113
  %v610 = vpop.permute.xlu0 %609
  %611 = vrot.lane.b32.xlu0 %v546, 113
  %v612 = vpop.permute.xlu0 %611
  %613 = vrot.lane.b32.xlu0 %v547, 113
  %v614 = vpop.permute.xlu0 %613
  %615 = vrot.lane.b32.xlu0 %v548, 113
  %v616 = vpop.permute.xlu0 %615
  %v617 = vsel %vm325, %v614, %v616
  %v618 = vsel %vm325, %v612, %v614
  %v619 = vsel %vm325, %v610, %v612
  %v620 = vsel %vm325, %v616, %v610
  %621 = vrot.lane.b32.xlu0 %v545, 112
  %v622 = vpop.permute.xlu0 %621
  %623 = vrot.lane.b32.xlu0 %v546, 112
  %v624 = vpop.permute.xlu0 %623
  %625 = vrot.lane.b32.xlu0 %v547, 112
  %v626 = vpop.permute.xlu0 %625
  %627 = vrot.lane.b32.xlu0 %v548, 112
  %v628 = vpop.permute.xlu0 %627
  %v629 = vsel %vm338, %v626, %v628
  %v630 = vsel %vm338, %v624, %v626
  %v631 = vsel %vm338, %v622, %v624
  %v632 = vsel %vm338, %v628, %v622
  %633 = vrot.lane.b32.xlu0 %v545, 111
  %v634 = vpop.permute.xlu0 %633
  %635 = vrot.lane.b32.xlu0 %v546, 111
  %v636 = vpop.permute.xlu0 %635
  %637 = vrot.lane.b32.xlu0 %v547, 111
  %v638 = vpop.permute.xlu0 %637
  %639 = vrot.lane.b32.xlu0 %v548, 111
  %v640 = vpop.permute.xlu0 %639
  %v641 = vsel %vm351, %v638, %v640
  %v642 = vsel %vm351, %v636, %v638
  %v643 = vsel %vm351, %v634, %v636
  %v644 = vsel %vm351, %v640, %v634
  %v645 = vmul.f32 %v560, %v65
  %v646 = vmul.f32 %v559, %v69
  %v647 = vmul.f32 %v558, %v73
  %v648 = vmul.f32 %v557, %v77
  %v649 = vmul.f32 %v572, %v86
  %v650 = vmul.f32 %v571, %v90
  %v651 = vmul.f32 %v570, %v94
  %v652 = vmul.f32 %v569, %v98
  %v653 = vmul.f32 %v584, %v107
  %v654 = vmul.f32 %v583, %v111
  %v655 = vmul.f32 %v582, %v115
  %v656 = vmul.f32 %v581, %v119
  %v657 = vmul.f32 %v596, %v128
  %v658 = vmul.f32 %v595, %v132
  %v659 = vmul.f32 %v594, %v136
  %v660 = vmul.f32 %v593, %v140
  %v661 = vmul.f32 %v545, %v149
  %v662 = vmul.f32 %v546, %v153
  %v663 = vmul.f32 %v547, %v157
  %v664 = vmul.f32 %v548, %v161
  %v665 = vmul.f32 %v607, %v170
  %v666 = vmul.f32 %v606, %v174
  %v667 = vmul.f32 %v605, %v178
  %v668 = vmul.f32 %v608, %v182
  %v669 = vmul.f32 %v619, %v191
  %v670 = vmul.f32 %v618, %v195
  %v671 = vmul.f32 %v617, %v199
  %v672 = vmul.f32 %v620, %v203
  %v673 = vmul.f32 %v631, %v212
  %v674 = vmul.f32 %v630, %v216
  %v675 = vmul.f32 %v629, %v220
  %v676 = vmul.f32 %v632, %v224
  %v677 = vmul.f32 %v643, %v233
  %v678 = vmul.f32 %v642, %v237
  %v679 = vmul.f32 %v641, %v241
  %v680 = vmul.f32 %v644, %v245
  %s681 = scalar_lea.vmem %s2, 8
  %v682 = vld [vmem:[%s681] sm:$0xff]
  %s683 = scalar_lea.vmem %s3, 8
  %v684 = vld [vmem:[%s683] sm:$0xff]
  %686 = vset.pattern.permute.xlu0 0
  %687 = vperm.xlu0 %686, %v684
  %v688 = vpop.permute.xlu0 %687
  %v691 = vsel %vm399, %v682, 0
  %693 = vmatprep.subr.mxu0 %v646
  %694 = vmatpush1.msra.mxu0 %v645
  %695 = vmatprep.subr.mxu0 %v650
  %696 = vmatpush1.msra.mxu0 %v649
  %697 = vmatprep.subr.mxu0 %v654
  %698 = vmatpush1.msra.mxu0 %v653
  %699 = vmatprep.subr.mxu0 %v658
  %700 = vmatpush1.msra.mxu0 %v657
  %701 = vmatprep.subr.mxu0 %v662
  %702 = vmatpush1.msra.mxu0 %v661
  %703 = vmatprep.subr.mxu0 %v666
  %704 = vmatpush1.msra.mxu0 %v665
  %705 = vmatprep.subr.mxu0 %v670
  %706 = vmatpush1.msra.mxu0 %v669
  %707 = vmatprep.subr.mxu0 %v674
  %708 = vmatpush1.msra.mxu0 %v673
  %709 = vmatprep.subr.mxu0 %v678
  %710 = vmatpush1.msra.mxu0 %v677
  %711 = vmatprep.subr.mxu0 0.0
  %712 = vmatpush1.msra.mxu0 0.0
  %713 = vmatprep.subr.mxu0 0.0
  %714 = vmatpush1.msra.mxu0 0.0
  %715 = vmatprep.subr.mxu0 0.0
  %716 = vmatpush1.msra.mxu0 0.0
  %717 = vmatprep.subr.mxu0 0.0
  %718 = vmatpush1.msra.mxu0 0.0
  %719 = vmatprep.subr.mxu0 0.0
  %720 = vmatpush1.msra.mxu0 0.0
  %721 = vmatprep.subr.mxu0 0.0
  %722 = vmatpush1.msra.mxu0 0.0
  %723 = vmatprep.subr.mxu0 0.0
  %724 = vmatpush1.msra.mxu0 0.0
  %725 = vmatprep.subr.mxu0 0.0
  %726 = vmatpush1.msra.mxu0 0.0
  %727 = vmatprep.subr.mxu0 0.0
  %728 = vmatpush1.msra.mxu0 0.0
  %729 = vmatprep.subr.mxu0 0.0
  %730 = vmatpush1.msra.mxu0 0.0
  %731 = vmatprep.subr.mxu0 0.0
  %732 = vmatpush1.msra.mxu0 0.0
  %733 = vmatprep.subr.mxu0 0.0
  %734 = vmatpush1.msra.mxu0 0.0
  %735 = vmatprep.subr.mxu0 0.0
  %736 = vmatpush1.msra.mxu0 0.0
  %737 = vmatprep.subr.mxu0 0.0
  %738 = vmatpush1.msra.mxu0 0.0
  %739 = vmatprep.subr.mxu0 0.0
  %740 = vmatpush1.msra.mxu0 0.0
  %741 = vmatprep.subr.mxu0 0.0
  %742 = vmatpush1.msra.mxu0 0.0
  %743 = vmatprep.subr.mxu0 0.0
  %744 = vmatpush1.msra.mxu0 0.0
  %745 = vmatprep.subr.mxu0 0.0
  %746 = vmatpush1.msra.mxu0 0.0
  %747 = vmatprep.subr.mxu0 0.0
  %748 = vmatpush1.msra.mxu0 0.0
  %749 = vmatprep.subr.mxu0 0.0
  %750 = vmatpush1.msra.mxu0 0.0
  %751 = vmatprep.subr.mxu0 0.0
  %752 = vmatpush1.msra.mxu0 0.0
  %753 = vmatprep.subr.mxu0 0.0
  %754 = vmatpush1.msra.mxu0 0.0
  %755 = vmatprep.subr.mxu0 0.0
  %756 = vmatpush1.msra.mxu0 0.0
  %757 = vmatprep.mubr.f32.mxu0 0.0
  %758 = vmatmul.mubr.f32.gmra.mrb[0].mxu0 %v691
  %v759 = vpop.f32.mrb[0].mxu0
  %v760 = vadd.f32 %v688, %v759
  %v761 = vpop.f32.mrb[0].mxu0
  %v762 = vadd.f32 %v688, %v761
  %763 = vdwg.mxu0
  %764 = vmatprep.subr.mxu0 %v648
  %765 = vmatpush1.msra.mxu0 %v647
  %766 = vmatprep.subr.mxu0 %v652
  %767 = vmatpush1.msra.mxu0 %v651
  %768 = vmatprep.subr.mxu0 %v656
  %769 = vmatpush1.msra.mxu0 %v655
  %770 = vmatprep.subr.mxu0 %v660
  %771 = vmatpush1.msra.mxu0 %v659
  %772 = vmatprep.subr.mxu0 %v664
  %773 = vmatpush1.msra.mxu0 %v663
  %774 = vmatprep.subr.mxu0 %v668
  %775 = vmatpush1.msra.mxu0 %v667
  %776 = vmatprep.subr.mxu0 %v672
  %777 = vmatpush1.msra.mxu0 %v671
  %778 = vmatprep.subr.mxu0 %v676
  %779 = vmatpush1.msra.mxu0 %v675
  %780 = vmatprep.subr.mxu0 %v680
  %781 = vmatpush1.msra.mxu0 %v679
  %782 = vmatprep.subr.mxu0 0.0
  %783 = vmatpush1.msra.mxu0 0.0
  %784 = vmatprep.subr.mxu0 0.0
  %785 = vmatpush1.msra.mxu0 0.0
  %786 = vmatprep.subr.mxu0 0.0
  %787 = vmatpush1.msra.mxu0 0.0
  %788 = vmatprep.subr.mxu0 0.0
  %789 = vmatpush1.msra.mxu0 0.0
  %790 = vmatprep.subr.mxu0 0.0
  %791 = vmatpush1.msra.mxu0 0.0
  %792 = vmatprep.subr.mxu0 0.0
  %793 = vmatpush1.msra.mxu0 0.0
  %794 = vmatprep.subr.mxu0 0.0
  %795 = vmatpush1.msra.mxu0 0.0
  %796 = vmatprep.subr.mxu0 0.0
  %797 = vmatpush1.msra.mxu0 0.0
  %798 = vmatprep.subr.mxu0 0.0
  %799 = vmatpush1.msra.mxu0 0.0
  %800 = vmatprep.subr.mxu0 0.0
  %801 = vmatpush1.msra.mxu0 0.0
  %802 = vmatprep.subr.mxu0 0.0
  %803 = vmatpush1.msra.mxu0 0.0
  %804 = vmatprep.subr.mxu0 0.0
  %805 = vmatpush1.msra.mxu0 0.0
  %806 = vmatprep.subr.mxu0 0.0
  %807 = vmatpush1.msra.mxu0 0.0
  %808 = vmatprep.subr.mxu0 0.0
  %809 = vmatpush1.msra.mxu0 0.0
  %810 = vmatprep.subr.mxu0 0.0
  %811 = vmatpush1.msra.mxu0 0.0
  %812 = vmatprep.subr.mxu0 0.0
  %813 = vmatpush1.msra.mxu0 0.0
  %814 = vmatprep.subr.mxu0 0.0
  %815 = vmatpush1.msra.mxu0 0.0
  %816 = vmatprep.subr.mxu0 0.0
  %817 = vmatpush1.msra.mxu0 0.0
  %818 = vmatprep.subr.mxu0 0.0
  %819 = vmatpush1.msra.mxu0 0.0
  %820 = vmatprep.subr.mxu0 0.0
  %821 = vmatpush1.msra.mxu0 0.0
  %822 = vmatprep.subr.mxu0 0.0
  %823 = vmatpush1.msra.mxu0 0.0
  %824 = vmatprep.subr.mxu0 0.0
  %825 = vmatpush1.msra.mxu0 0.0
  %826 = vmatprep.subr.mxu0 0.0
  %827 = vmatpush1.msra.mxu0 0.0
  %828 = vmatprep.mubr.f32.mxu0 0.0
  %829 = vmatmul.mubr.f32.gmra.mrb[0].mxu0 %v691
  %v830 = vpop.f32.mrb[0].mxu0
  %v831 = vadd.f32 %v688, %v830
  %v832 = vpop.f32.mrb[0].mxu0
  %v833 = vadd.f32 %v688, %v832
  %834 = vdwg.mxu0
  %v835 = vmax.f32 %v760, 0.0
  %v836 = vmax.f32 %v762, 0.0
  %v837 = vmax.f32 %v831, 0.0
  %v838 = vmax.f32 %v833, 0.0
  %839 = vrot.lane.b32.xlu0 %v835, 17
  %v840 = vpop.permute.xlu0 %839
  %841 = vrot.lane.b32.xlu0 %v836, 17
  %v842 = vpop.permute.xlu0 %841
  %843 = vrot.lane.b32.xlu0 %v837, 17
  %v844 = vpop.permute.xlu0 %843
  %845 = vrot.lane.b32.xlu0 %v838, 17
  %v846 = vpop.permute.xlu0 %845
  %v847 = vsel %vm260, %v844, %v846
  %v848 = vsel %vm260, %v842, %v844
  %v849 = vsel %vm260, %v840, %v842
  %v850 = vsel %vm260, %v846, %v840
  %851 = vrot.lane.b32.xlu0 %v835, 16
  %v852 = vpop.permute.xlu0 %851
  %853 = vrot.lane.b32.xlu0 %v836, 16
  %v854 = vpop.permute.xlu0 %853
  %855 = vrot.lane.b32.xlu0 %v837, 16
  %v856 = vpop.permute.xlu0 %855
  %857 = vrot.lane.b32.xlu0 %v838, 16
  %v858 = vpop.permute.xlu0 %857
  %v859 = vsel %vm273, %v856, %v858
  %v860 = vsel %vm273, %v854, %v856
  %v861 = vsel %vm273, %v852, %v854
  %v862 = vsel %vm273, %v858, %v852
  %863 = vrot.lane.b32.xlu0 %v835, 15
  %v864 = vpop.permute.xlu0 %863
  %865 = vrot.lane.b32.xlu0 %v836, 15
  %v866 = vpop.permute.xlu0 %865
  %867 = vrot.lane.b32.xlu0 %v837, 15
  %v868 = vpop.permute.xlu0 %867
  %869 = vrot.lane.b32.xlu0 %v838, 15
  %v870 = vpop.permute.xlu0 %869
  %v871 = vsel %vm286, %v868, %v870
  %v872 = vsel %vm286, %v866, %v868
  %v873 = vsel %vm286, %v864, %v866
  %v874 = vsel %vm286, %v870, %v864
  %875 = vrot.lane.b32.xlu0 %v835, 1
  %v876 = vpop.permute.xlu0 %875
  %877 = vrot.lane.b32.xlu0 %v836, 1
  %v878 = vpop.permute.xlu0 %877
  %879 = vrot.lane.b32.xlu0 %v837, 1
  %v880 = vpop.permute.xlu0 %879
  %881 = vrot.lane.b32.xlu0 %v838, 1
  %v882 = vpop.permute.xlu0 %881
  %v883 = vsel %vm299, %v880, %v882
  %v884 = vsel %vm299, %v878, %v880
  %v885 = vsel %vm299, %v876, %v878
  %v886 = vsel %vm299, %v882, %v876
  %887 = vrot.lane.b32.xlu0 %v835, 127
  %v888 = vpop.permute.xlu0 %887
  %889 = vrot.lane.b32.xlu0 %v836, 127
  %v890 = vpop.permute.xlu0 %889
  %891 = vrot.lane.b32.xlu0 %v837, 127
  %v892 = vpop.permute.xlu0 %891
  %893 = vrot.lane.b32.xlu0 %v838, 127
  %v894 = vpop.permute.xlu0 %893
  %v895 = vsel %vm312, %v892, %v894
  %v896 = vsel %vm312, %v890, %v892
  %v897 = vsel %vm312, %v888, %v890
  %v898 = vsel %vm312, %v894, %v888
  %899 = vrot.lane.b32.xlu0 %v835, 113
  %v900 = vpop.permute.xlu0 %899
  %901 = vrot.lane.b32.xlu0 %v836, 113
  %v902 = vpop.permute.xlu0 %901
  %903 = vrot.lane.b32.xlu0 %v837, 113
  %v904 = vpop.permute.xlu0 %903
  %905 = vrot.lane.b32.xlu0 %v838, 113
  %v906 = vpop.permute.xlu0 %905
  %v907 = vsel %vm325, %v904, %v906
  %v908 = vsel %vm325, %v902, %v904
  %v909 = vsel %vm325, %v900, %v902
  %v910 = vsel %vm325, %v906, %v900
  %911 = vrot.lane.b32.xlu0 %v835, 112
  %v912 = vpop.permute.xlu0 %911
  %913 = vrot.lane.b32.xlu0 %v836, 112
  %v914 = vpop.permute.xlu0 %913
  %915 = vrot.lane.b32.xlu0 %v837, 112
  %v916 = vpop.permute.xlu0 %915
  %917 = vrot.lane.b32.xlu0 %v838, 112
  %v918 = vpop.permute.xlu0 %917
  %v919 = vsel %vm338, %v916, %v918
  %v920 = vsel %vm338, %v914, %v916
  %v921 = vsel %vm338, %v912, %v914
  %v922 = vsel %vm338, %v918, %v912
  %923 = vrot.lane.b32.xlu0 %v835, 111
  %v924 = vpop.permute.xlu0 %923
  %925 = vrot.lane.b32.xlu0 %v836, 111
  %v926 = vpop.permute.xlu0 %925
  %927 = vrot.lane.b32.xlu0 %v837, 111
  %v928 = vpop.permute.xlu0 %927
  %929 = vrot.lane.b32.xlu0 %v838, 111
  %v930 = vpop.permute.xlu0 %929
  %v931 = vsel %vm351, %v928, %v930
  %v932 = vsel %vm351, %v926, %v928
  %v933 = vsel %vm351, %v924, %v926
  %v934 = vsel %vm351, %v930, %v924
  %v935 = vmul.f32 %v850, %v65
  %v936 = vmul.f32 %v849, %v69
  %v937 = vmul.f32 %v848, %v73
  %v938 = vmul.f32 %v847, %v77
  %v939 = vmul.f32 %v862, %v86
  %v940 = vmul.f32 %v861, %v90
  %v941 = vmul.f32 %v860, %v94
  %v942 = vmul.f32 %v859, %v98
  %v943 = vmul.f32 %v874, %v107
  %v944 = vmul.f32 %v873, %v111
  %v945 = vmul.f32 %v872, %v115
  %v946 = vmul.f32 %v871, %v119
  %v947 = vmul.f32 %v886, %v128
  %v948 = vmul.f32 %v885, %v132
  %v949 = vmul.f32 %v884, %v136
  %v950 = vmul.f32 %v883, %v140
  %v951 = vmul.f32 %v835, %v149
  %v952 = vmul.f32 %v836, %v153
  %v953 = vmul.f32 %v837, %v157
  %v954 = vmul.f32 %v838, %v161
  %v955 = vmul.f32 %v897, %v170
  %v956 = vmul.f32 %v896, %v174
  %v957 = vmul.f32 %v895, %v178
  %v958 = vmul.f32 %v898, %v182
  %v959 = vmul.f32 %v909, %v191
  %v960 = vmul.f32 %v908, %v195
  %v961 = vmul.f32 %v907, %v199
  %v962 = vmul.f32 %v910, %v203
  %v963 = vmul.f32 %v921, %v212
  %v964 = vmul.f32 %v920, %v216
  %v965 = vmul.f32 %v919, %v220
  %v966 = vmul.f32 %v922, %v224
  %v967 = vmul.f32 %v933, %v233
  %v968 = vmul.f32 %v932, %v237
  %v969 = vmul.f32 %v931, %v241
  %v970 = vmul.f32 %v934, %v245
  %s971 = scalar_lea.vmem %s2, 16
  %v972 = vld [vmem:[%s971] sm:$0xff]
  %s973 = scalar_lea.vmem %s3, 16
  %v974 = vld [vmem:[%s973] sm:$0xff]
  %976 = vset.pattern.permute.xlu0 0
  %977 = vperm.xlu0 %976, %v974
  %v978 = vpop.permute.xlu0 %977
  %v981 = vsel %vm399, %v972, 0
  %983 = vmatprep.subr.mxu0 %v936
  %984 = vmatpush1.msra.mxu0 %v935
  %985 = vmatprep.subr.mxu0 %v940
  %986 = vmatpush1.msra.mxu0 %v939
  %987 = vmatprep.subr.mxu0 %v944
  %988 = vmatpush1.msra.mxu0 %v943
  %989 = vmatprep.subr.mxu0 %v948
  %990 = vmatpush1.msra.mxu0 %v947
  %991 = vmatprep.subr.mxu0 %v952
  %992 = vmatpush1.msra.mxu0 %v951
  %993 = vmatprep.subr.mxu0 %v956
  %994 = vmatpush1.msra.mxu0 %v955
  %995 = vmatprep.subr.mxu0 %v960
  %996 = vmatpush1.msra.mxu0 %v959
  %997 = vmatprep.subr.mxu0 %v964
  %998 = vmatpush1.msra.mxu0 %v963
  %999 = vmatprep.subr.mxu0 %v968
  %1000 = vmatpush1.msra.mxu0 %v967
  %1001 = vmatprep.subr.mxu0 0.0
  %1002 = vmatpush1.msra.mxu0 0.0
  %1003 = vmatprep.subr.mxu0 0.0
  %1004 = vmatpush1.msra.mxu0 0.0
  %1005 = vmatprep.subr.mxu0 0.0
  %1006 = vmatpush1.msra.mxu0 0.0
  %1007 = vmatprep.subr.mxu0 0.0
  %1008 = vmatpush1.msra.mxu0 0.0
  %1009 = vmatprep.subr.mxu0 0.0
  %1010 = vmatpush1.msra.mxu0 0.0
  %1011 = vmatprep.subr.mxu0 0.0
  %1012 = vmatpush1.msra.mxu0 0.0
  %1013 = vmatprep.subr.mxu0 0.0
  %1014 = vmatpush1.msra.mxu0 0.0
  %1015 = vmatprep.subr.mxu0 0.0
  %1016 = vmatpush1.msra.mxu0 0.0
  %1017 = vmatprep.subr.mxu0 0.0
  %1018 = vmatpush1.msra.mxu0 0.0
  %1019 = vmatprep.subr.mxu0 0.0
  %1020 = vmatpush1.msra.mxu0 0.0
  %1021 = vmatprep.subr.mxu0 0.0
  %1022 = vmatpush1.msra.mxu0 0.0
  %1023 = vmatprep.subr.mxu0 0.0
  %1024 = vmatpush1.msra.mxu0 0.0
  %1025 = vmatprep.subr.mxu0 0.0
  %1026 = vmatpush1.msra.mxu0 0.0
  %1027 = vmatprep.subr.mxu0 0.0
  %1028 = vmatpush1.msra.mxu0 0.0
  %1029 = vmatprep.subr.mxu0 0.0
  %1030 = vmatpush1.msra.mxu0 0.0
  %1031 = vmatprep.subr.mxu0 0.0
  %1032 = vmatpush1.msra.mxu0 0.0
  %1033 = vmatprep.subr.mxu0 0.0
  %1034 = vmatpush1.msra.mxu0 0.0
  %1035 = vmatprep.subr.mxu0 0.0
  %1036 = vmatpush1.msra.mxu0 0.0
  %1037 = vmatprep.subr.mxu0 0.0
  %1038 = vmatpush1.msra.mxu0 0.0
  %1039 = vmatprep.subr.mxu0 0.0
  %1040 = vmatpush1.msra.mxu0 0.0
  %1041 = vmatprep.subr.mxu0 0.0
  %1042 = vmatpush1.msra.mxu0 0.0
  %1043 = vmatprep.subr.mxu0 0.0
  %1044 = vmatpush1.msra.mxu0 0.0
  %1045 = vmatprep.subr.mxu0 0.0
  %1046 = vmatpush1.msra.mxu0 0.0
  %1047 = vmatprep.mubr.f32.mxu0 0.0
  %1048 = vmatmul.mubr.f32.gmra.mrb[0].mxu0 %v981
  %v1049 = vpop.f32.mrb[0].mxu0
  %v1050 = vadd.f32 %v978, %v1049
  %v1051 = vpop.f32.mrb[0].mxu0
  %v1052 = vadd.f32 %v978, %v1051
  %1053 = vdwg.mxu0
  %1054 = vmatprep.subr.mxu0 %v938
  %1055 = vmatpush1.msra.mxu0 %v937
  %1056 = vmatprep.subr.mxu0 %v942
  %1057 = vmatpush1.msra.mxu0 %v941
  %1058 = vmatprep.subr.mxu0 %v946
  %1059 = vmatpush1.msra.mxu0 %v945
  %1060 = vmatprep.subr.mxu0 %v950
  %1061 = vmatpush1.msra.mxu0 %v949
  %1062 = vmatprep.subr.mxu0 %v954
  %1063 = vmatpush1.msra.mxu0 %v953
  %1064 = vmatprep.subr.mxu0 %v958
  %1065 = vmatpush1.msra.mxu0 %v957
  %1066 = vmatprep.subr.mxu0 %v962
  %1067 = vmatpush1.msra.mxu0 %v961
  %1068 = vmatprep.subr.mxu0 %v966
  %1069 = vmatpush1.msra.mxu0 %v965
  %1070 = vmatprep.subr.mxu0 %v970
  %1071 = vmatpush1.msra.mxu0 %v969
  %1072 = vmatprep.subr.mxu0 0.0
  %1073 = vmatpush1.msra.mxu0 0.0
  %1074 = vmatprep.subr.mxu0 0.0
  %1075 = vmatpush1.msra.mxu0 0.0
  %1076 = vmatprep.subr.mxu0 0.0
  %1077 = vmatpush1.msra.mxu0 0.0
  %1078 = vmatprep.subr.mxu0 0.0
  %1079 = vmatpush1.msra.mxu0 0.0
  %1080 = vmatprep.subr.mxu0 0.0
  %1081 = vmatpush1.msra.mxu0 0.0
  %1082 = vmatprep.subr.mxu0 0.0
  %1083 = vmatpush1.msra.mxu0 0.0
  %1084 = vmatprep.subr.mxu0 0.0
  %1085 = vmatpush1.msra.mxu0 0.0
  %1086 = vmatprep.subr.mxu0 0.0
  %1087 = vmatpush1.msra.mxu0 0.0
  %1088 = vmatprep.subr.mxu0 0.0
  %1089 = vmatpush1.msra.mxu0 0.0
  %1090 = vmatprep.subr.mxu0 0.0
  %1091 = vmatpush1.msra.mxu0 0.0
  %1092 = vmatprep.subr.mxu0 0.0
  %1093 = vmatpush1.msra.mxu0 0.0
  %1094 = vmatprep.subr.mxu0 0.0
  %1095 = vmatpush1.msra.mxu0 0.0
  %1096 = vmatprep.subr.mxu0 0.0
  %1097 = vmatpush1.msra.mxu0 0.0
  %1098 = vmatprep.subr.mxu0 0.0
  %1099 = vmatpush1.msra.mxu0 0.0
  %1100 = vmatprep.subr.mxu0 0.0
  %1101 = vmatpush1.msra.mxu0 0.0
  %1102 = vmatprep.subr.mxu0 0.0
  %1103 = vmatpush1.msra.mxu0 0.0
  %1104 = vmatprep.subr.mxu0 0.0
  %1105 = vmatpush1.msra.mxu0 0.0
  %1106 = vmatprep.subr.mxu0 0.0
  %1107 = vmatpush1.msra.mxu0 0.0
  %1108 = vmatprep.subr.mxu0 0.0
  %1109 = vmatpush1.msra.mxu0 0.0
  %1110 = vmatprep.subr.mxu0 0.0
  %1111 = vmatpush1.msra.mxu0 0.0
  %1112 = vmatprep.subr.mxu0 0.0
  %1113 = vmatpush1.msra.mxu0 0.0
  %1114 = vmatprep.subr.mxu0 0.0
  %1115 = vmatpush1.msra.mxu0 0.0
  %1116 = vmatprep.subr.mxu0 0.0
  %1117 = vmatpush1.msra.mxu0 0.0
  %1118 = vmatprep.mubr.f32.mxu0 0.0
  %1119 = vmatmul.mubr.f32.gmra.mrb[0].mxu0 %v981
  %v1120 = vpop.f32.mrb[0].mxu0
  %v1121 = vadd.f32 %v978, %v1120
  %v1122 = vpop.f32.mrb[0].mxu0
  %v1123 = vadd.f32 %v978, %v1122
  %1124 = vdwg.mxu0
  %v1129 = vcombine.low %v1050, %v1052
  %v1130 = vcombine.low %v1121, %v1123
  %v1132 = vunpack.c.l.s4 1983009808
  %v1133 = vunpack.c.0.s8 %v1132
  %v1134 = vlaneseq
  %v1135 = vshrl.u32 %v1134, 7
  %v1136 = vsub.s32 %v1133, %v1135
  %v1137 = vrot.slane %v1129, %v1136
  %v1139 = vunpack.c.l.s4 1983009808
  %v1140 = vunpack.c.0.s8 %v1139
  %v1141 = vlaneseq
  %v1142 = vshrl.u32 %v1141, 7
  %v1143 = vsub.s32 %v1140, %v1142
  %v1144 = vrot.slane %v1130, %v1143
  %v1145 = vcombine.low %v1137, %v1144
  %v1147 = vadd.f32 %v24, %v1145
  %v1148 = vld [vmem:[%s4] sm:$0xff]
  %v1149 = vsub.f32 %v1147, %v1148
  %s1150 = sld [smem:[#allocation2]]
  %v1151 = vstv %s1150
  %v1152 = vmul.f32 %v1149, %v1151
  %v1153 = vsub.f32 %v1147, %v1152
  %1154 = vst [vmem:[%s6] sm:$0xff] %v1153
  // Predicated region
  $region26: #{xpdnet_block2_forward.3} parent=0 // pred_check
    _
  $region27: #{xpdnet_block2_forward.3} parent=0 // pred_check_branch
    %1156 = sbr.rel (0) target = $region29
  $region28: #{xpdnet_block2_forward.3} parent=0 // pred_region
    _
  $region29: #{xpdnet_block2_forward.3} parent=0 // pred_fallthru
    _
  // Predicated region
  $region30: #{xpdnet_block2_forward.3} parent=0 // pred_check
    _
  $region31: #{xpdnet_block2_forward.3} parent=0 // pred_check_branch
    %1158 = sbr.rel (0) target = $region33
  $region32: #{xpdnet_block2_forward.3} parent=0 // pred_region
    _
  $region33: #{xpdnet_block2_forward.3} parent=0 // pred_fallthru
    _

</llo_original>
